<compile_context>
chip_gen: v7x
topology: tpu7x:2x2x1
jax: 0.10.0
libtpu: 0.0.40
codegen_flags: <defaults>
</compile_context>

<pallas_src>
import numpy as np
import jax
import jax.numpy as jnp
from jax import lax
from jax.experimental import pallas as pl
from jax.experimental.pallas import tpu as pltpu


# ----------------------------- Pallas kernel --------------------------------
def lstm_recurrence_kernel(xproj_ref, lens_ref, whh0_ref, wih1_ref, whh1_ref,
                           b1_ref, hlast_ref):
    T, B, _ = xproj_ref.shape
    H = whh0_ref.shape[0]

    # Weights are tiny at these sizes; load once and keep them in vregs.
    whh0 = whh0_ref[...]
    wih1 = wih1_ref[...]
    whh1 = whh1_ref[...]
    b1 = b1_ref[...]
    last_t = lens_ref[...] - 1                      # (B, 1) int32

    def gate_math(gates, c_prev):
        sig = jax.nn.sigmoid(gates)                 # full-width (B, 4H) EUP
        tnh = jnp.tanh(gates)                       # full-width (B, 4H) EUP
        i = sig[:, 0 * H:1 * H]
        f = sig[:, 1 * H:2 * H]
        g = tnh[:, 2 * H:3 * H]
        o = sig[:, 3 * H:4 * H]
        c_new = f * c_prev + i * g
        h_new = o * jnp.tanh(c_new)
        return h_new, c_new

    def step(t, carry):
        h0, c0, h1, c1, h_last = carry
        # Layer 0: input projection + bias already folded into xproj.
        gates0 = xproj_ref[t] + jnp.dot(h0, whh0,
                                        preferred_element_type=jnp.float32)
        h0n, c0n = gate_math(gates0, c0)
        # Layer 1: two K=H dots (avoids a sub-128-lane concat at H=32).
        gates1 = (jnp.dot(h0n, wih1, preferred_element_type=jnp.float32)
                  + jnp.dot(h1, whh1, preferred_element_type=jnp.float32)
                  + b1)
        h1n, c1n = gate_math(gates1, c1)
        # Keep the hidden state of the last valid timestep of each sequence.
        h_last = jnp.where(last_t == t, h1n, h_last)
        return h0n, c0n, h1n, c1n, h_last

    zeros = jnp.zeros((B, H), jnp.float32)
    carry = (zeros, zeros, zeros, zeros, zeros)
    carry = lax.fori_loop(0, T, step, carry, unroll=True)
    hlast_ref[...] = carry[4]


def lstm_forward_pallas(padded_tm, lengths, params):
    T, B, D = padded_tm.shape
    H = params["whh0"].shape[0]

    # Hoisted layer-0 input projection: one (T*B, D) @ (D, 4H) matmul instead
    # of T tiny K=D matmuls inside the recurrence.  Plain XLA is fine here.
    xproj = (jnp.einsum("tbd,dg->tbg", padded_tm, params["wih0"])
             + params["b0"]).astype(jnp.float32)    # (T, B, 4H)

    lens_2d = lengths.astype(jnp.int32).reshape(B, 1)

    vmem = pl.BlockSpec(memory_space=pltpu.MemorySpace.VMEM)
    h_last = pl.pallas_call(
        lstm_recurrence_kernel,
        out_shape=jax.ShapeDtypeStruct((B, H), jnp.float32),
        in_specs=[vmem] * 6,
        out_specs=vmem,
    )(xproj, lens_2d, params["whh0"], params["wih1"], params["whh1"],
      params["b1"])

    # Linear head applied once to the selected last-step hidden states.
    y = h_last @ params["wlin"] + params["blin"]    # (B, 1)
    return y[:, 0]


# --------------------------- parameter init ----------------------------------
def init_params(key, D, H):
    bound = 1.0 / np.sqrt(H)
    keys = jax.random.split(key, 10)

    def u(k, shape):
        return jax.random.uniform(k, shape, jnp.float32, -bound, bound)

    w_ih0 = u(keys[0], (4 * H, D)); w_hh0 = u(keys[1], (4 * H, H))
    b_ih0 = u(keys[2], (4 * H,));   b_hh0 = u(keys[3], (4 * H,))
    w_ih1 = u(keys[4], (4 * H, H)); w_hh1 = u(keys[5], (4 * H, H))
    b_ih1 = u(keys[6], (4 * H,));   b_hh1 = u(keys[7], (4 * H,))
    w_lin = u(keys[8], (1, H));     b_lin = u(keys[9], (1,))

    return {
        "wih0": w_ih0.T, "whh0": w_hh0.T, "b0": (b_ih0 + b_hh0)[None, :],
        "wih1": w_ih1.T, "whh1": w_hh1.T, "b1": (b_ih1 + b_hh1)[None, :],
        "wlin": w_lin.T, "blin": b_lin[None, :],
    }


# ------------------------- pure-JAX reference --------------------------------
def lstm_ref(padded_btd, lengths, params):
    B, T, D = padded_btd.shape
    H = params["whh0"].shape[0]
    h0 = jnp.zeros((B, H)); c0 = jnp.zeros((B, H))
    h1 = jnp.zeros((B, H)); c1 = jnp.zeros((B, H))

    def cell(x, h, c, wih, whh, b):
        g = x @ wih + h @ whh + b
        i = jax.nn.sigmoid(g[:, :H]); f = jax.nn.sigmoid(g[:, H:2 * H])
        gg = jnp.tanh(g[:, 2 * H:3 * H]); o = jax.nn.sigmoid(g[:, 3 * H:])
        c = f * c + i * gg
        h = o * jnp.tanh(c)
        return h, c

    outs = []
    for t in range(T):
        x_t = padded_btd[:, t, :]
        h0, c0 = cell(x_t, h0, c0, params["wih0"], params["whh0"], params["b0"])
        h1, c1 = cell(h0, h1, c1, params["wih1"], params["whh1"], params["b1"])
        outs.append(h1 @ params["wlin"] + params["blin"])
    y = jnp.stack(outs, axis=1)                      # (B, T, 1)
    return y[jnp.arange(B), lengths - 1, 0]


# --------------------------------- main ---------------------------------------
if __name__ == "__main__":
    # synthetic trace setup (mirrors the module's global trace bookkeeping)
    traces_lens = np.array([3, 5])
    batch_first_trace_idx = 0
    batch_last_trace_idx = 1

    input_dim = 4
    hidden_dim = 32
    total_events = int(traces_lens.sum())      # 8 events => batch_size = 8
    batch_size = total_events
    seq_len = int(traces_lens.max())           # 5

    key = jax.random.PRNGKey(0)
    k_ev, k_par = jax.random.split(key)
    events = jax.random.normal(k_ev, (total_events, input_dim), jnp.float32)
    params = init_params(k_par, input_dim, hidden_dim)

    # --- replicate the padded-batch / lengths construction from forward() ----
    events_np = np.asarray(events)
    padded = np.zeros((batch_size, seq_len, input_dim), np.float32)
    trace_idx = batch_first_trace_idx
    first_event_idx = 0
    last_event_idx = traces_lens[trace_idx] - 1
    for i in range(total_events):
        if not i <= last_event_idx:
            first_event_idx += traces_lens[trace_idx]
            trace_idx += 1
            last_event_idx += traces_lens[trace_idx]
        for j in range(0, i - first_event_idx + 1):
            padded[i][j] += events_np[first_event_idx + j]
    lengths = []
    for i in range(batch_first_trace_idx, batch_last_trace_idx + 1):
        lengths += list(range(1, traces_lens[i] + 1))
    lengths = np.array(lengths, np.int32)

    padded_tm = jnp.asarray(padded.transpose(1, 0, 2))   # (T, B, D)
    lengths_j = jnp.asarray(lengths)

    # --- run Pallas kernel ----------------------------------------------------
    y_pred = lstm_forward_pallas(padded_tm, lengths_j, params)
    y_pred = jax.block_until_ready(y_pred)

    # --- sanity check against pure-JAX reference -------------------------------
    y_ref = np.asarray(lstm_ref(jnp.asarray(padded), lengths, params))
    np.testing.assert_allclose(np.asarray(y_pred), y_ref, rtol=1e-4, atol=1e-4)

    print("KERNEL_OK")
</pallas_src>

<mosaic_0001>
module attributes {stable_mosaic.version = 11 : i64} {
  func.func @lstm_recurrence_kernel(%arg0: memref<5x8x128xf32, #tpu.memory_space<vmem>>, %arg1: memref<8x1xi32, #tpu.memory_space<vmem>>, %arg2: memref<32x128xf32, #tpu.memory_space<vmem>>, %arg3: memref<32x128xf32, #tpu.memory_space<vmem>>, %arg4: memref<32x128xf32, #tpu.memory_space<vmem>>, %arg5: memref<1x128xf32, #tpu.memory_space<vmem>>, %arg6: memref<8x32xf32, #tpu.memory_space<vmem>>) attributes {dimension_semantics = [], scalar_prefetch = 0 : i64, scratch_operands = 0 : i64, tpu.core_type = #tpu.core_type<tc>} {
    %c0 = arith.constant 0 : index
    %c0_0 = arith.constant 0 : index
    %0 = vector.load %arg2[%c0, %c0_0] : memref<32x128xf32, #tpu.memory_space<vmem>>, vector<32x128xf32>
    %c0_1 = arith.constant 0 : index
    %c0_2 = arith.constant 0 : index
    %1 = vector.load %arg3[%c0_1, %c0_2] : memref<32x128xf32, #tpu.memory_space<vmem>>, vector<32x128xf32>
    %c0_3 = arith.constant 0 : index
    %c0_4 = arith.constant 0 : index
    %2 = vector.load %arg4[%c0_3, %c0_4] : memref<32x128xf32, #tpu.memory_space<vmem>>, vector<32x128xf32>
    %c0_5 = arith.constant 0 : index
    %c0_6 = arith.constant 0 : index
    %3 = vector.load %arg5[%c0_5, %c0_6] : memref<1x128xf32, #tpu.memory_space<vmem>>, vector<1x128xf32>
    %c0_7 = arith.constant 0 : index
    %c0_8 = arith.constant 0 : index
    %4 = vector.load %arg1[%c0_7, %c0_8] : memref<8x1xi32, #tpu.memory_space<vmem>>, vector<8x1xi32>
    %c1_i32 = arith.constant 1 : i32
    %5 = vector.broadcast %c1_i32 : i32 to vector<8x1xi32>
    %6 = arith.subi %4, %5 : vector<8x1xi32>
    %cst = arith.constant 0.000000e+00 : f32
    %7 = vector.broadcast %cst : f32 to vector<8x32xf32>
    %c0_i32 = arith.constant 0 : i32
    %8 = arith.index_cast %c0_i32 : i32 to index
    %c0_9 = arith.constant 0 : index
    %c0_10 = arith.constant 0 : index
    %9 = vector.load %arg0[%8, %c0_9, %c0_10] : memref<5x8x128xf32, #tpu.memory_space<vmem>>, vector<1x8x128xf32>
    %10 = vector.shape_cast %9 : vector<1x8x128xf32> to vector<8x128xf32>
    %cst_11 = arith.constant dense<0.000000e+00> : vector<8x128xf32>
    %11 = tpu.matmul %7, %0, %cst_11 {dimension_numbers = #tpu.dot_dimension_numbers<[1], [0], [0], [1], [0, 0, 1, 1], [], []>} : vector<8x32xf32>, vector<32x128xf32>, vector<8x128xf32> -> vector<8x128xf32>
    %12 = arith.addf %10, %11 : vector<8x128xf32>
    %13 = arith.negf %12 : vector<8x128xf32>
    %14 = math.exp %13 : vector<8x128xf32>
    %cst_12 = arith.constant 1.000000e+00 : f32
    %15 = vector.broadcast %cst_12 : f32 to vector<8x128xf32>
    %16 = arith.addf %15, %14 : vector<8x128xf32>
    %17 = arith.divf %15, %16 : vector<8x128xf32>
    %18 = math.tanh %12 : vector<8x128xf32>
    %19 = vector.extract_strided_slice %17 {offsets = [0, 0], sizes = [8, 32], strides = [1, 1]} : vector<8x128xf32> to vector<8x32xf32>
    %20 = vector.extract_strided_slice %17 {offsets = [0, 32], sizes = [8, 32], strides = [1, 1]} : vector<8x128xf32> to vector<8x32xf32>
    %21 = vector.extract_strided_slice %18 {offsets = [0, 64], sizes = [8, 32], strides = [1, 1]} : vector<8x128xf32> to vector<8x32xf32>
    %22 = vector.extract_strided_slice %17 {offsets = [0, 96], sizes = [8, 32], strides = [1, 1]} : vector<8x128xf32> to vector<8x32xf32>
    %23 = arith.mulf %20, %7 : vector<8x32xf32>
    %24 = arith.mulf %19, %21 : vector<8x32xf32>
    %25 = arith.addf %23, %24 : vector<8x32xf32>
    %26 = math.tanh %25 : vector<8x32xf32>
    %27 = arith.mulf %22, %26 : vector<8x32xf32>
    %cst_13 = arith.constant dense<0.000000e+00> : vector<8x128xf32>
    %28 = tpu.matmul %27, %1, %cst_13 {dimension_numbers = #tpu.dot_dimension_numbers<[1], [0], [0], [1], [0, 0, 1, 1], [], []>} : vector<8x32xf32>, vector<32x128xf32>, vector<8x128xf32> -> vector<8x128xf32>
    %cst_14 = arith.constant dense<0.000000e+00> : vector<8x128xf32>
    %29 = tpu.matmul %7, %2, %cst_14 {dimension_numbers = #tpu.dot_dimension_numbers<[1], [0], [0], [1], [0, 0, 1, 1], [], []>} : vector<8x32xf32>, vector<32x128xf32>, vector<8x128xf32> -> vector<8x128xf32>
    %30 = arith.addf %28, %29 : vector<8x128xf32>
    %31 = vector.broadcast %3 : vector<1x128xf32> to vector<8x128xf32>
    %32 = arith.addf %30, %31 : vector<8x128xf32>
    %33 = arith.negf %32 : vector<8x128xf32>
    %34 = math.exp %33 : vector<8x128xf32>
    %cst_15 = arith.constant 1.000000e+00 : f32
    %35 = vector.broadcast %cst_15 : f32 to vector<8x128xf32>
    %36 = arith.addf %35, %34 : vector<8x128xf32>
    %37 = arith.divf %35, %36 : vector<8x128xf32>
    %38 = math.tanh %32 : vector<8x128xf32>
    %39 = vector.extract_strided_slice %37 {offsets = [0, 0], sizes = [8, 32], strides = [1, 1]} : vector<8x128xf32> to vector<8x32xf32>
    %40 = vector.extract_strided_slice %37 {offsets = [0, 32], sizes = [8, 32], strides = [1, 1]} : vector<8x128xf32> to vector<8x32xf32>
    %41 = vector.extract_strided_slice %38 {offsets = [0, 64], sizes = [8, 32], strides = [1, 1]} : vector<8x128xf32> to vector<8x32xf32>
    %42 = vector.extract_strided_slice %37 {offsets = [0, 96], sizes = [8, 32], strides = [1, 1]} : vector<8x128xf32> to vector<8x32xf32>
    %43 = arith.mulf %40, %7 : vector<8x32xf32>
    %44 = arith.mulf %39, %41 : vector<8x32xf32>
    %45 = arith.addf %43, %44 : vector<8x32xf32>
    %46 = math.tanh %45 : vector<8x32xf32>
    %47 = arith.mulf %42, %46 : vector<8x32xf32>
    %48 = vector.broadcast %c0_i32 : i32 to vector<8x1xi32>
    %49 = arith.cmpi eq, %6, %48 : vector<8x1xi32>
    %50 = vector.shape_cast %49 : vector<8x1xi1> to vector<8x1xi1>
    %51 = vector.broadcast %50 : vector<8x1xi1> to vector<8x32xi1>
    %52 = arith.select %51, %47, %7 : vector<8x32xi1>, vector<8x32xf32>
    %c1_i32_16 = arith.constant 1 : i32
    %53 = arith.index_cast %c1_i32_16 : i32 to index
    %c0_17 = arith.constant 0 : index
    %c0_18 = arith.constant 0 : index
    %54 = vector.load %arg0[%53, %c0_17, %c0_18] : memref<5x8x128xf32, #tpu.memory_space<vmem>>, vector<1x8x128xf32>
    %55 = vector.shape_cast %54 : vector<1x8x128xf32> to vector<8x128xf32>
    %cst_19 = arith.constant dense<0.000000e+00> : vector<8x128xf32>
    %56 = tpu.matmul %27, %0, %cst_19 {dimension_numbers = #tpu.dot_dimension_numbers<[1], [0], [0], [1], [0, 0, 1, 1], [], []>} : vector<8x32xf32>, vector<32x128xf32>, vector<8x128xf32> -> vector<8x128xf32>
    %57 = arith.addf %55, %56 : vector<8x128xf32>
    %58 = arith.negf %57 : vector<8x128xf32>
    %59 = math.exp %58 : vector<8x128xf32>
    %cst_20 = arith.constant 1.000000e+00 : f32
    %60 = vector.broadcast %cst_20 : f32 to vector<8x128xf32>
    %61 = arith.addf %60, %59 : vector<8x128xf32>
    %62 = arith.divf %60, %61 : vector<8x128xf32>
    %63 = math.tanh %57 : vector<8x128xf32>
    %64 = vector.extract_strided_slice %62 {offsets = [0, 0], sizes = [8, 32], strides = [1, 1]} : vector<8x128xf32> to vector<8x32xf32>
    %65 = vector.extract_strided_slice %62 {offsets = [0, 32], sizes = [8, 32], strides = [1, 1]} : vector<8x128xf32> to vector<8x32xf32>
    %66 = vector.extract_strided_slice %63 {offsets = [0, 64], sizes = [8, 32], strides = [1, 1]} : vector<8x128xf32> to vector<8x32xf32>
    %67 = vector.extract_strided_slice %62 {offsets = [0, 96], sizes = [8, 32], strides = [1, 1]} : vector<8x128xf32> to vector<8x32xf32>
    %68 = arith.mulf %65, %25 : vector<8x32xf32>
    %69 = arith.mulf %64, %66 : vector<8x32xf32>
    %70 = arith.addf %68, %69 : vector<8x32xf32>
    %71 = math.tanh %70 : vector<8x32xf32>
    %72 = arith.mulf %67, %71 : vector<8x32xf32>
    %cst_21 = arith.constant dense<0.000000e+00> : vector<8x128xf32>
    %73 = tpu.matmul %72, %1, %cst_21 {dimension_numbers = #tpu.dot_dimension_numbers<[1], [0], [0], [1], [0, 0, 1, 1], [], []>} : vector<8x32xf32>, vector<32x128xf32>, vector<8x128xf32> -> vector<8x128xf32>
    %cst_22 = arith.constant dense<0.000000e+00> : vector<8x128xf32>
    %74 = tpu.matmul %47, %2, %cst_22 {dimension_numbers = #tpu.dot_dimension_numbers<[1], [0], [0], [1], [0, 0, 1, 1], [], []>} : vector<8x32xf32>, vector<32x128xf32>, vector<8x128xf32> -> vector<8x128xf32>
    %75 = arith.addf %73, %74 : vector<8x128xf32>
    %76 = vector.broadcast %3 : vector<1x128xf32> to vector<8x128xf32>
    %77 = arith.addf %75, %76 : vector<8x128xf32>
    %78 = arith.negf %77 : vector<8x128xf32>
    %79 = math.exp %78 : vector<8x128xf32>
    %cst_23 = arith.constant 1.000000e+00 : f32
    %80 = vector.broadcast %cst_23 : f32 to vector<8x128xf32>
    %81 = arith.addf %80, %79 : vector<8x128xf32>
    %82 = arith.divf %80, %81 : vector<8x128xf32>
    %83 = math.tanh %77 : vector<8x128xf32>
    %84 = vector.extract_strided_slice %82 {offsets = [0, 0], sizes = [8, 32], strides = [1, 1]} : vector<8x128xf32> to vector<8x32xf32>
    %85 = vector.extract_strided_slice %82 {offsets = [0, 32], sizes = [8, 32], strides = [1, 1]} : vector<8x128xf32> to vector<8x32xf32>
    %86 = vector.extract_strided_slice %83 {offsets = [0, 64], sizes = [8, 32], strides = [1, 1]} : vector<8x128xf32> to vector<8x32xf32>
    %87 = vector.extract_strided_slice %82 {offsets = [0, 96], sizes = [8, 32], strides = [1, 1]} : vector<8x128xf32> to vector<8x32xf32>
    %88 = arith.mulf %85, %45 : vector<8x32xf32>
    %89 = arith.mulf %84, %86 : vector<8x32xf32>
    %90 = arith.addf %88, %89 : vector<8x32xf32>
    %91 = math.tanh %90 : vector<8x32xf32>
    %92 = arith.mulf %87, %91 : vector<8x32xf32>
    %93 = vector.broadcast %c1_i32_16 : i32 to vector<8x1xi32>
    %94 = arith.cmpi eq, %6, %93 : vector<8x1xi32>
    %95 = vector.shape_cast %94 : vector<8x1xi1> to vector<8x1xi1>
    %96 = vector.broadcast %95 : vector<8x1xi1> to vector<8x32xi1>
    %97 = arith.select %96, %92, %52 : vector<8x32xi1>, vector<8x32xf32>
    %c2_i32 = arith.constant 2 : i32
    %98 = arith.index_cast %c2_i32 : i32 to index
    %c0_24 = arith.constant 0 : index
    %c0_25 = arith.constant 0 : index
    %99 = vector.load %arg0[%98, %c0_24, %c0_25] : memref<5x8x128xf32, #tpu.memory_space<vmem>>, vector<1x8x128xf32>
    %100 = vector.shape_cast %99 : vector<1x8x128xf32> to vector<8x128xf32>
    %cst_26 = arith.constant dense<0.000000e+00> : vector<8x128xf32>
    %101 = tpu.matmul %72, %0, %cst_26 {dimension_numbers = #tpu.dot_dimension_numbers<[1], [0], [0], [1], [0, 0, 1, 1], [], []>} : vector<8x32xf32>, vector<32x128xf32>, vector<8x128xf32> -> vector<8x128xf32>
    %102 = arith.addf %100, %101 : vector<8x128xf32>
    %103 = arith.negf %102 : vector<8x128xf32>
    %104 = math.exp %103 : vector<8x128xf32>
    %cst_27 = arith.constant 1.000000e+00 : f32
    %105 = vector.broadcast %cst_27 : f32 to vector<8x128xf32>
    %106 = arith.addf %105, %104 : vector<8x128xf32>
    %107 = arith.divf %105, %106 : vector<8x128xf32>
    %108 = math.tanh %102 : vector<8x128xf32>
    %109 = vector.extract_strided_slice %107 {offsets = [0, 0], sizes = [8, 32], strides = [1, 1]} : vector<8x128xf32> to vector<8x32xf32>
    %110 = vector.extract_strided_slice %107 {offsets = [0, 32], sizes = [8, 32], strides = [1, 1]} : vector<8x128xf32> to vector<8x32xf32>
    %111 = vector.extract_strided_slice %108 {offsets = [0, 64], sizes = [8, 32], strides = [1, 1]} : vector<8x128xf32> to vector<8x32xf32>
    %112 = vector.extract_strided_slice %107 {offsets = [0, 96], sizes = [8, 32], strides = [1, 1]} : vector<8x128xf32> to vector<8x32xf32>
    %113 = arith.mulf %110, %70 : vector<8x32xf32>
    %114 = arith.mulf %109, %111 : vector<8x32xf32>
    %115 = arith.addf %113, %114 : vector<8x32xf32>
    %116 = math.tanh %115 : vector<8x32xf32>
    %117 = arith.mulf %112, %116 : vector<8x32xf32>
    %cst_28 = arith.constant dense<0.000000e+00> : vector<8x128xf32>
    %118 = tpu.matmul %117, %1, %cst_28 {dimension_numbers = #tpu.dot_dimension_numbers<[1], [0], [0], [1], [0, 0, 1, 1], [], []>} : vector<8x32xf32>, vector<32x128xf32>, vector<8x128xf32> -> vector<8x128xf32>
    %cst_29 = arith.constant dense<0.000000e+00> : vector<8x128xf32>
    %119 = tpu.matmul %92, %2, %cst_29 {dimension_numbers = #tpu.dot_dimension_numbers<[1], [0], [0], [1], [0, 0, 1, 1], [], []>} : vector<8x32xf32>, vector<32x128xf32>, vector<8x128xf32> -> vector<8x128xf32>
    %120 = arith.addf %118, %119 : vector<8x128xf32>
    %121 = vector.broadcast %3 : vector<1x128xf32> to vector<8x128xf32>
    %122 = arith.addf %120, %121 : vector<8x128xf32>
    %123 = arith.negf %122 : vector<8x128xf32>
    %124 = math.exp %123 : vector<8x128xf32>
    %cst_30 = arith.constant 1.000000e+00 : f32
    %125 = vector.broadcast %cst_30 : f32 to vector<8x128xf32>
    %126 = arith.addf %125, %124 : vector<8x128xf32>
    %127 = arith.divf %125, %126 : vector<8x128xf32>
    %128 = math.tanh %122 : vector<8x128xf32>
    %129 = vector.extract_strided_slice %127 {offsets = [0, 0], sizes = [8, 32], strides = [1, 1]} : vector<8x128xf32> to vector<8x32xf32>
    %130 = vector.extract_strided_slice %127 {offsets = [0, 32], sizes = [8, 32], strides = [1, 1]} : vector<8x128xf32> to vector<8x32xf32>
    %131 = vector.extract_strided_slice %128 {offsets = [0, 64], sizes = [8, 32], strides = [1, 1]} : vector<8x128xf32> to vector<8x32xf32>
    %132 = vector.extract_strided_slice %127 {offsets = [0, 96], sizes = [8, 32], strides = [1, 1]} : vector<8x128xf32> to vector<8x32xf32>
    %133 = arith.mulf %130, %90 : vector<8x32xf32>
    %134 = arith.mulf %129, %131 : vector<8x32xf32>
    %135 = arith.addf %133, %134 : vector<8x32xf32>
    %136 = math.tanh %135 : vector<8x32xf32>
    %137 = arith.mulf %132, %136 : vector<8x32xf32>
    %138 = vector.broadcast %c2_i32 : i32 to vector<8x1xi32>
    %139 = arith.cmpi eq, %6, %138 : vector<8x1xi32>
    %140 = vector.shape_cast %139 : vector<8x1xi1> to vector<8x1xi1>
    %141 = vector.broadcast %140 : vector<8x1xi1> to vector<8x32xi1>
    %142 = arith.select %141, %137, %97 : vector<8x32xi1>, vector<8x32xf32>
    %c3_i32 = arith.constant 3 : i32
    %143 = arith.index_cast %c3_i32 : i32 to index
    %c0_31 = arith.constant 0 : index
    %c0_32 = arith.constant 0 : index
    %144 = vector.load %arg0[%143, %c0_31, %c0_32] : memref<5x8x128xf32, #tpu.memory_space<vmem>>, vector<1x8x128xf32>
    %145 = vector.shape_cast %144 : vector<1x8x128xf32> to vector<8x128xf32>
    %cst_33 = arith.constant dense<0.000000e+00> : vector<8x128xf32>
    %146 = tpu.matmul %117, %0, %cst_33 {dimension_numbers = #tpu.dot_dimension_numbers<[1], [0], [0], [1], [0, 0, 1, 1], [], []>} : vector<8x32xf32>, vector<32x128xf32>, vector<8x128xf32> -> vector<8x128xf32>
    %147 = arith.addf %145, %146 : vector<8x128xf32>
    %148 = arith.negf %147 : vector<8x128xf32>
    %149 = math.exp %148 : vector<8x128xf32>
    %cst_34 = arith.constant 1.000000e+00 : f32
    %150 = vector.broadcast %cst_34 : f32 to vector<8x128xf32>
    %151 = arith.addf %150, %149 : vector<8x128xf32>
    %152 = arith.divf %150, %151 : vector<8x128xf32>
    %153 = math.tanh %147 : vector<8x128xf32>
    %154 = vector.extract_strided_slice %152 {offsets = [0, 0], sizes = [8, 32], strides = [1, 1]} : vector<8x128xf32> to vector<8x32xf32>
    %155 = vector.extract_strided_slice %152 {offsets = [0, 32], sizes = [8, 32], strides = [1, 1]} : vector<8x128xf32> to vector<8x32xf32>
    %156 = vector.extract_strided_slice %153 {offsets = [0, 64], sizes = [8, 32], strides = [1, 1]} : vector<8x128xf32> to vector<8x32xf32>
    %157 = vector.extract_strided_slice %152 {offsets = [0, 96], sizes = [8, 32], strides = [1, 1]} : vector<8x128xf32> to vector<8x32xf32>
    %158 = arith.mulf %155, %115 : vector<8x32xf32>
    %159 = arith.mulf %154, %156 : vector<8x32xf32>
    %160 = arith.addf %158, %159 : vector<8x32xf32>
    %161 = math.tanh %160 : vector<8x32xf32>
    %162 = arith.mulf %157, %161 : vector<8x32xf32>
    %cst_35 = arith.constant dense<0.000000e+00> : vector<8x128xf32>
    %163 = tpu.matmul %162, %1, %cst_35 {dimension_numbers = #tpu.dot_dimension_numbers<[1], [0], [0], [1], [0, 0, 1, 1], [], []>} : vector<8x32xf32>, vector<32x128xf32>, vector<8x128xf32> -> vector<8x128xf32>
    %cst_36 = arith.constant dense<0.000000e+00> : vector<8x128xf32>
    %164 = tpu.matmul %137, %2, %cst_36 {dimension_numbers = #tpu.dot_dimension_numbers<[1], [0], [0], [1], [0, 0, 1, 1], [], []>} : vector<8x32xf32>, vector<32x128xf32>, vector<8x128xf32> -> vector<8x128xf32>
    %165 = arith.addf %163, %164 : vector<8x128xf32>
    %166 = vector.broadcast %3 : vector<1x128xf32> to vector<8x128xf32>
    %167 = arith.addf %165, %166 : vector<8x128xf32>
    %168 = arith.negf %167 : vector<8x128xf32>
    %169 = math.exp %168 : vector<8x128xf32>
    %cst_37 = arith.constant 1.000000e+00 : f32
    %170 = vector.broadcast %cst_37 : f32 to vector<8x128xf32>
    %171 = arith.addf %170, %169 : vector<8x128xf32>
    %172 = arith.divf %170, %171 : vector<8x128xf32>
    %173 = math.tanh %167 : vector<8x128xf32>
    %174 = vector.extract_strided_slice %172 {offsets = [0, 0], sizes = [8, 32], strides = [1, 1]} : vector<8x128xf32> to vector<8x32xf32>
    %175 = vector.extract_strided_slice %172 {offsets = [0, 32], sizes = [8, 32], strides = [1, 1]} : vector<8x128xf32> to vector<8x32xf32>
    %176 = vector.extract_strided_slice %173 {offsets = [0, 64], sizes = [8, 32], strides = [1, 1]} : vector<8x128xf32> to vector<8x32xf32>
    %177 = vector.extract_strided_slice %172 {offsets = [0, 96], sizes = [8, 32], strides = [1, 1]} : vector<8x128xf32> to vector<8x32xf32>
    %178 = arith.mulf %175, %135 : vector<8x32xf32>
    %179 = arith.mulf %174, %176 : vector<8x32xf32>
    %180 = arith.addf %178, %179 : vector<8x32xf32>
    %181 = math.tanh %180 : vector<8x32xf32>
    %182 = arith.mulf %177, %181 : vector<8x32xf32>
    %183 = vector.broadcast %c3_i32 : i32 to vector<8x1xi32>
    %184 = arith.cmpi eq, %6, %183 : vector<8x1xi32>
    %185 = vector.shape_cast %184 : vector<8x1xi1> to vector<8x1xi1>
    %186 = vector.broadcast %185 : vector<8x1xi1> to vector<8x32xi1>
    %187 = arith.select %186, %182, %142 : vector<8x32xi1>, vector<8x32xf32>
    %c4_i32 = arith.constant 4 : i32
    %188 = arith.index_cast %c4_i32 : i32 to index
    %c0_38 = arith.constant 0 : index
    %c0_39 = arith.constant 0 : index
    %189 = vector.load %arg0[%188, %c0_38, %c0_39] : memref<5x8x128xf32, #tpu.memory_space<vmem>>, vector<1x8x128xf32>
    %190 = vector.shape_cast %189 : vector<1x8x128xf32> to vector<8x128xf32>
    %cst_40 = arith.constant dense<0.000000e+00> : vector<8x128xf32>
    %191 = tpu.matmul %162, %0, %cst_40 {dimension_numbers = #tpu.dot_dimension_numbers<[1], [0], [0], [1], [0, 0, 1, 1], [], []>} : vector<8x32xf32>, vector<32x128xf32>, vector<8x128xf32> -> vector<8x128xf32>
    %192 = arith.addf %190, %191 : vector<8x128xf32>
    %193 = arith.negf %192 : vector<8x128xf32>
    %194 = math.exp %193 : vector<8x128xf32>
    %cst_41 = arith.constant 1.000000e+00 : f32
    %195 = vector.broadcast %cst_41 : f32 to vector<8x128xf32>
    %196 = arith.addf %195, %194 : vector<8x128xf32>
    %197 = arith.divf %195, %196 : vector<8x128xf32>
    %198 = math.tanh %192 : vector<8x128xf32>
    %199 = vector.extract_strided_slice %197 {offsets = [0, 0], sizes = [8, 32], strides = [1, 1]} : vector<8x128xf32> to vector<8x32xf32>
    %200 = vector.extract_strided_slice %197 {offsets = [0, 32], sizes = [8, 32], strides = [1, 1]} : vector<8x128xf32> to vector<8x32xf32>
    %201 = vector.extract_strided_slice %198 {offsets = [0, 64], sizes = [8, 32], strides = [1, 1]} : vector<8x128xf32> to vector<8x32xf32>
    %202 = vector.extract_strided_slice %197 {offsets = [0, 96], sizes = [8, 32], strides = [1, 1]} : vector<8x128xf32> to vector<8x32xf32>
    %203 = arith.mulf %200, %160 : vector<8x32xf32>
    %204 = arith.mulf %199, %201 : vector<8x32xf32>
    %205 = arith.addf %203, %204 : vector<8x32xf32>
    %206 = math.tanh %205 : vector<8x32xf32>
    %207 = arith.mulf %202, %206 : vector<8x32xf32>
    %cst_42 = arith.constant dense<0.000000e+00> : vector<8x128xf32>
    %208 = tpu.matmul %207, %1, %cst_42 {dimension_numbers = #tpu.dot_dimension_numbers<[1], [0], [0], [1], [0, 0, 1, 1], [], []>} : vector<8x32xf32>, vector<32x128xf32>, vector<8x128xf32> -> vector<8x128xf32>
    %cst_43 = arith.constant dense<0.000000e+00> : vector<8x128xf32>
    %209 = tpu.matmul %182, %2, %cst_43 {dimension_numbers = #tpu.dot_dimension_numbers<[1], [0], [0], [1], [0, 0, 1, 1], [], []>} : vector<8x32xf32>, vector<32x128xf32>, vector<8x128xf32> -> vector<8x128xf32>
    %210 = arith.addf %208, %209 : vector<8x128xf32>
    %211 = vector.broadcast %3 : vector<1x128xf32> to vector<8x128xf32>
    %212 = arith.addf %210, %211 : vector<8x128xf32>
    %213 = arith.negf %212 : vector<8x128xf32>
    %214 = math.exp %213 : vector<8x128xf32>
    %cst_44 = arith.constant 1.000000e+00 : f32
    %215 = vector.broadcast %cst_44 : f32 to vector<8x128xf32>
    %216 = arith.addf %215, %214 : vector<8x128xf32>
    %217 = arith.divf %215, %216 : vector<8x128xf32>
    %218 = math.tanh %212 : vector<8x128xf32>
    %219 = vector.extract_strided_slice %217 {offsets = [0, 0], sizes = [8, 32], strides = [1, 1]} : vector<8x128xf32> to vector<8x32xf32>
    %220 = vector.extract_strided_slice %217 {offsets = [0, 32], sizes = [8, 32], strides = [1, 1]} : vector<8x128xf32> to vector<8x32xf32>
    %221 = vector.extract_strided_slice %218 {offsets = [0, 64], sizes = [8, 32], strides = [1, 1]} : vector<8x128xf32> to vector<8x32xf32>
    %222 = vector.extract_strided_slice %217 {offsets = [0, 96], sizes = [8, 32], strides = [1, 1]} : vector<8x128xf32> to vector<8x32xf32>
    %223 = arith.mulf %220, %180 : vector<8x32xf32>
    %224 = arith.mulf %219, %221 : vector<8x32xf32>
    %225 = arith.addf %223, %224 : vector<8x32xf32>
    %226 = math.tanh %225 : vector<8x32xf32>
    %227 = arith.mulf %222, %226 : vector<8x32xf32>
    %228 = vector.broadcast %c4_i32 : i32 to vector<8x1xi32>
    %229 = arith.cmpi eq, %6, %228 : vector<8x1xi32>
    %230 = vector.shape_cast %229 : vector<8x1xi1> to vector<8x1xi1>
    %231 = vector.broadcast %230 : vector<8x1xi1> to vector<8x32xi1>
    %232 = arith.select %231, %227, %187 : vector<8x32xi1>, vector<8x32xf32>
    %c5_i32 = arith.constant 5 : i32
    %c0_45 = arith.constant 0 : index
    %c0_46 = arith.constant 0 : index
    %233 = vector.load %arg6[%c0_45, %c0_46] : memref<8x32xf32, #tpu.memory_space<vmem>>, vector<8x32xf32>
    tpu.vector_store %arg6[%c0_45, %c0_46], %232 {strides = array<i32>} : memref<8x32xf32, #tpu.memory_space<vmem>>, vector<8x32xf32>,
    return
  }
}

</mosaic_0001>

<llo_original>
// kernel: tpu_custom_call.1
$region0: #{tpu_custom_call.1}
  #allocation0 [shape = 'u32[]', space=smem, size = 0x4, offset = 0x4, fixed_abs, tag = 'smem constant byte address 0x4 - core index']
  #allocation1 [shape = 'u32[144,128]{1,0:T(1,128)}', space=vmem, size = 0x12000, scoped, tag = 'internal scratch']
  %s0 = inlined_call_operand.hbm [shape: f32[5,8,128], index: 0, kind: input, shape index: {}]
  %s1 = inlined_call_operand.vmem [shape: s32[8,1], index: 1, kind: input, shape index: {}]
  %s2 = inlined_call_operand.hbm [shape: f32[32,128], index: 2, kind: input, shape index: {}]
  %s3 = inlined_call_operand.hbm [shape: f32[32,128], index: 3, kind: input, shape index: {}]
  %s4 = inlined_call_operand.hbm [shape: f32[32,128], index: 4, kind: input, shape index: {}]
  %s5 = inlined_call_operand.vmem [shape: f32[1,128], index: 5, kind: input, shape index: {}]
  %s6 = inlined_call_operand.hbm [shape: f32[8,32], index: 6, kind: output, shape index: {}]
  %s7 = sld [smem:[#allocation0]]
  $region50: #{tpu_custom_call.1} parent=0
    _
  %s9 = ssub.s32 1, %s7
  %s10 = scalar_select 0, %s9, %s7
  $region1: #{tpu_custom_call.1} parent=0
    #allocation2 [shape = 'u8[20480]{0}', space=vmem, size = 0x5000, scoped, tag = 'input window, operand 0, single buffered']
    #allocation3 [shape = 's32[1]{0}', space=sflag, size = 0x4, scoped, tag = 'scoped memory for tpu_custom_call.1']
    #allocation4 [shape = 's32[1]{0}', space=sflag, size = 0x4, scoped, tag = 'scoped memory for tpu_custom_call.1']
    #allocation5 [shape = 'u8[16384]{0}', space=vmem, size = 0x4000, scoped, tag = 'input window, operand 2, single buffered']
    #allocation6 [shape = 's32[1]{0}', space=sflag, size = 0x4, scoped, tag = 'scoped memory for tpu_custom_call.1']
    #allocation7 [shape = 'u8[16384]{0}', space=vmem, size = 0x4000, scoped, tag = 'input window, operand 3, single buffered']
    #allocation8 [shape = 'u8[16384]{0}', space=vmem, size = 0x4000, scoped, tag = 'input window, operand 4, single buffered']
    #allocation9 [shape = 's32[1]{0}', space=sflag, size = 0x4, scoped, tag = 'scoped memory for tpu_custom_call.1']
    #allocation10 [shape = 'u8[4096]{0}', space=vmem, size = 0x1000, scoped, tag = 'output window, operand 0, single buffered']
    %11 = vsyncpa [#allocation3], 0
    %12 = vsyncpa [#allocation6], 0
    %13 = vsyncpa [#allocation9], 0
    %14 = vsyncpa [#allocation4], 0
    // Predicated region
    $region2: #{tpu_custom_call.1} parent=1 // pred_check
      _
    $region3: #{tpu_custom_call.1} parent=1 // pred_check_branch
      %16 = sbr.rel (0) target = $region5
    $region4: #{tpu_custom_call.1} parent=1 // pred_region
      %s18 = ssub.s32 640, 640
      %19 = vsyncadd [#allocation3], %s18
      %s20 = sshll.u32 [#allocation2], 4
      %s21 = int_to_ptr.vmem [resolvable:$true] %s20
      %26 = dma.hbm_to_vmem [thread:$0]  %s0, 640, %s21, [#allocation3], 128, 128, 8
    $region5: #{tpu_custom_call.1} parent=1 // pred_fallthru
      _
    // Predicated region
    $region6: #{tpu_custom_call.1} parent=1 // pred_check
      _
    $region7: #{tpu_custom_call.1} parent=1 // pred_check_branch
      %28 = sbr.rel (0) target = $region9
    $region8: #{tpu_custom_call.1} parent=1 // pred_region
      _
    $region9: #{tpu_custom_call.1} parent=1 // pred_fallthru
      _
    // Predicated region
    $region10: #{tpu_custom_call.1} parent=1 // pred_check
      _
    $region11: #{tpu_custom_call.1} parent=1 // pred_check_branch
      %30 = sbr.rel (0) target = $region13
    $region12: #{tpu_custom_call.1} parent=1 // pred_region
      %s32 = ssub.s32 512, 512
      %33 = vsyncadd [#allocation6], %s32
      %s34 = sshll.u32 [#allocation5], 4
      %s35 = int_to_ptr.vmem [resolvable:$true] %s34
      %40 = dma.hbm_to_vmem [thread:$0]  %s2, 512, %s35, [#allocation6], 128, 128, 8
    $region13: #{tpu_custom_call.1} parent=1 // pred_fallthru
      _
    // Predicated region
    $region14: #{tpu_custom_call.1} parent=1 // pred_check
      _
    $region15: #{tpu_custom_call.1} parent=1 // pred_check_branch
      %42 = sbr.rel (0) target = $region17
    $region16: #{tpu_custom_call.1} parent=1 // pred_region
      %s44 = ssub.s32 512, 512
      %45 = vsyncadd [#allocation6], %s44
      %s46 = sshll.u32 [#allocation7], 4
      %s47 = int_to_ptr.vmem [resolvable:$true] %s46
      %52 = dma.hbm_to_vmem [thread:$0]  %s3, 512, %s47, [#allocation6], 128, 128, 8
    $region17: #{tpu_custom_call.1} parent=1 // pred_fallthru
      _
    // Predicated region
    $region18: #{tpu_custom_call.1} parent=1 // pred_check
      _
    $region19: #{tpu_custom_call.1} parent=1 // pred_check_branch
      %54 = sbr.rel (0) target = $region21
    $region20: #{tpu_custom_call.1} parent=1 // pred_region
      %s56 = ssub.s32 512, 512
      %57 = vsyncadd [#allocation9], %s56
      %s58 = sshll.u32 [#allocation8], 4
      %s59 = int_to_ptr.vmem [resolvable:$true] %s58
      %64 = dma.hbm_to_vmem [thread:$0]  %s4, 512, %s59, [#allocation9], 128, 128, 8
    $region21: #{tpu_custom_call.1} parent=1 // pred_fallthru
      _
    // Predicated region
    $region22: #{tpu_custom_call.1} parent=1 // pred_check
      _
    $region23: #{tpu_custom_call.1} parent=1 // pred_check_branch
      %66 = sbr.rel (0) target = $region25
    $region24: #{tpu_custom_call.1} parent=1 // pred_region
      _
    $region25: #{tpu_custom_call.1} parent=1 // pred_fallthru
      _
    // Predicated region
    $region26: #{tpu_custom_call.1} parent=1 // pred_check
      _
    $region27: #{tpu_custom_call.1} parent=1 // pred_check_branch
      %68 = sbr.rel (0) target = $region29
    $region28: #{tpu_custom_call.1} parent=1 // pred_region
      %69 = dma.done [#allocation3], 640
    $region29: #{tpu_custom_call.1} parent=1 // pred_fallthru
      _
    // Predicated region
    $region30: #{tpu_custom_call.1} parent=1 // pred_check
      _
    $region31: #{tpu_custom_call.1} parent=1 // pred_check_branch
      %71 = sbr.rel (0) target = $region33
    $region32: #{tpu_custom_call.1} parent=1 // pred_region
      %72 = dma.done [#allocation6], 512
    $region33: #{tpu_custom_call.1} parent=1 // pred_fallthru
      _
    // Predicated region
    $region34: #{tpu_custom_call.1} parent=1 // pred_check
      _
    $region35: #{tpu_custom_call.1} parent=1 // pred_check_branch
      %74 = sbr.rel (0) target = $region37
    $region36: #{tpu_custom_call.1} parent=1 // pred_region
      %75 = dma.done [#allocation6], 512
    $region37: #{tpu_custom_call.1} parent=1 // pred_fallthru
      _
    // Predicated region
    $region38: #{tpu_custom_call.1} parent=1 // pred_check
      _
    $region39: #{tpu_custom_call.1} parent=1 // pred_check_branch
      %77 = sbr.rel (0) target = $region41
    $region40: #{tpu_custom_call.1} parent=1 // pred_region
      %78 = dma.done [#allocation9], 512
    $region41: #{tpu_custom_call.1} parent=1 // pred_fallthru
      _
    %v79 = vld [vmem:[#allocation5] sm:$0xff]
    %v80 = vld [vmem:[#allocation5 + $0x8] sm:$0xff]
    %v81 = vld [vmem:[#allocation5 + $0x10] sm:$0xff]
    %v82 = vld [vmem:[#allocation5 + $0x18] sm:$0xff]
    %v83 = vld [vmem:[#allocation7] sm:$0xff]
    %v84 = vld [vmem:[#allocation7 + $0x8] sm:$0xff]
    %v85 = vld [vmem:[#allocation7 + $0x10] sm:$0xff]
    %v86 = vld [vmem:[#allocation7 + $0x18] sm:$0xff]
    %v87 = vld [vmem:[#allocation8] sm:$0xff]
    %v88 = vld [vmem:[#allocation8 + $0x8] sm:$0xff]
    %v89 = vld [vmem:[#allocation8 + $0x10] sm:$0xff]
    %v90 = vld [vmem:[#allocation8 + $0x18] sm:$0xff]
    %v91 = vld [vmem:[%s5] sm:$0x1]
    %v92 = vld [vmem:[%s1] sm:$0xff]
    %v93 = vsub.s32 %v92, 1
    %v94 = vld [vmem:[#allocation2] sm:$0xff]
    %vm95 = vcmask 261120
    %v97 = vsel %vm95, 0.0, 0
    %99 = vmatprep.subr.mxu0 0.0
    %100 = vmatpush1.msra.mxu0 %v79
    %101 = vmatprep.subr.mxu0 0.0
    %102 = vmatpush1.msra.mxu0 %v80
    %103 = vmatprep.subr.mxu0 0.0
    %104 = vmatpush1.msra.mxu0 %v81
    %105 = vmatprep.subr.mxu0 0.0
    %106 = vmatpush1.msra.mxu0 %v82
    %107 = vmatprep.subr.mxu0 0.0
    %108 = vmatpush1.msra.mxu0 0.0
    %109 = vmatprep.subr.mxu0 0.0
    %110 = vmatpush1.msra.mxu0 0.0
    %111 = vmatprep.subr.mxu0 0.0
    %112 = vmatpush1.msra.mxu0 0.0
    %113 = vmatprep.subr.mxu0 0.0
    %114 = vmatpush1.msra.mxu0 0.0
    %115 = vmatprep.subr.mxu0 0.0
    %116 = vmatpush1.msra.mxu0 0.0
    %117 = vmatprep.subr.mxu0 0.0
    %118 = vmatpush1.msra.mxu0 0.0
    %119 = vmatprep.subr.mxu0 0.0
    %120 = vmatpush1.msra.mxu0 0.0
    %121 = vmatprep.subr.mxu0 0.0
    %122 = vmatpush1.msra.mxu0 0.0
    %123 = vmatprep.subr.mxu0 0.0
    %124 = vmatpush1.msra.mxu0 0.0
    %125 = vmatprep.subr.mxu0 0.0
    %126 = vmatpush1.msra.mxu0 0.0
    %127 = vmatprep.subr.mxu0 0.0
    %128 = vmatpush1.msra.mxu0 0.0
    %129 = vmatprep.subr.mxu0 0.0
    %130 = vmatpush1.msra.mxu0 0.0
    %131 = vmatprep.subr.mxu0 0.0
    %132 = vmatpush1.msra.mxu0 0.0
    %133 = vmatprep.subr.mxu0 0.0
    %134 = vmatpush1.msra.mxu0 0.0
    %135 = vmatprep.subr.mxu0 0.0
    %136 = vmatpush1.msra.mxu0 0.0
    %137 = vmatprep.subr.mxu0 0.0
    %138 = vmatpush1.msra.mxu0 0.0
    %139 = vmatprep.subr.mxu0 0.0
    %140 = vmatpush1.msra.mxu0 0.0
    %141 = vmatprep.subr.mxu0 0.0
    %142 = vmatpush1.msra.mxu0 0.0
    %143 = vmatprep.subr.mxu0 0.0
    %144 = vmatpush1.msra.mxu0 0.0
    %145 = vmatprep.subr.mxu0 0.0
    %146 = vmatpush1.msra.mxu0 0.0
    %147 = vmatprep.subr.mxu0 0.0
    %148 = vmatpush1.msra.mxu0 0.0
    %149 = vmatprep.subr.mxu0 0.0
    %150 = vmatpush1.msra.mxu0 0.0
    %151 = vmatprep.subr.mxu0 0.0
    %152 = vmatpush1.msra.mxu0 0.0
    %153 = vmatprep.subr.mxu0 0.0
    %154 = vmatpush1.msra.mxu0 0.0
    %155 = vmatprep.subr.mxu0 0.0
    %156 = vmatpush1.msra.mxu0 0.0
    %157 = vmatprep.subr.mxu0 0.0
    %158 = vmatpush1.msra.mxu0 0.0
    %159 = vmatprep.subr.mxu0 0.0
    %160 = vmatpush1.msra.mxu0 0.0
    %161 = vmatprep.subr.mxu0 0.0
    %162 = vmatpush1.msra.mxu0 0.0
    %163 = vmatprep.mubr.f32.mxu0 0.0
    %164 = vmatmul.mubr.f32.gmra.mrb[0].mxu0 %v97
    %v165 = vpop.f32.mrb[0].mxu0
    %v166 = vadd.f32 0.0, %v165
    %v167 = vpop.f32.mrb[0].mxu0
    %168 = vdwg.mxu0
    %v169 = vadd.f32 %v94, %v166
    %v170 = vxor.u32 %v169, 2147483648
    %v171 = vmul.f32 %v170, 1.442695
    %v172 = vpow.pop %v171
    %v173 = vadd.f32 %v172, 1.0
    %v174 = vrcp.pop %v173
    %v175 = vmul.f32 1.0, %v174
    %v176 = vtanh.pop %v169
    %v177 = vmul.f32 %v175, 0.0
    %179 = vrot.lane.b32.xlu0 %v176, 64
    %v180 = vpop.permute.xlu0 %179
    %v182 = vmul.f32 %v175, %v180
    %184 = vrot.lane.b32.xlu0 %v182, 32
    %v185 = vpop.permute.xlu0 %184
    %v187 = vadd.f32 %v177, %v185
    %v188 = vtanh.pop %v187
    %190 = vrot.lane.b32.xlu0 %v188, 64
    %v191 = vpop.permute.xlu0 %190
    %v193 = vmul.f32 %v175, %v191
    %194 = vmatprep.subr.mxu0 0.0
    %195 = vmatpush1.msra.mxu0 %v87
    %196 = vmatprep.subr.mxu0 0.0
    %197 = vmatpush1.msra.mxu0 %v88
    %198 = vmatprep.subr.mxu0 0.0
    %199 = vmatpush1.msra.mxu0 %v89
    %200 = vmatprep.subr.mxu0 0.0
    %201 = vmatpush1.msra.mxu0 %v90
    %202 = vmatprep.subr.mxu0 0.0
    %203 = vmatpush1.msra.mxu0 0.0
    %204 = vmatprep.subr.mxu0 0.0
    %205 = vmatpush1.msra.mxu0 0.0
    %206 = vmatprep.subr.mxu0 0.0
    %207 = vmatpush1.msra.mxu0 0.0
    %208 = vmatprep.subr.mxu0 0.0
    %209 = vmatpush1.msra.mxu0 0.0
    %210 = vmatprep.subr.mxu0 0.0
    %211 = vmatpush1.msra.mxu0 0.0
    %212 = vmatprep.subr.mxu0 0.0
    %213 = vmatpush1.msra.mxu0 0.0
    %214 = vmatprep.subr.mxu0 0.0
    %215 = vmatpush1.msra.mxu0 0.0
    %216 = vmatprep.subr.mxu0 0.0
    %217 = vmatpush1.msra.mxu0 0.0
    %218 = vmatprep.subr.mxu0 0.0
    %219 = vmatpush1.msra.mxu0 0.0
    %220 = vmatprep.subr.mxu0 0.0
    %221 = vmatpush1.msra.mxu0 0.0
    %222 = vmatprep.subr.mxu0 0.0
    %223 = vmatpush1.msra.mxu0 0.0
    %224 = vmatprep.subr.mxu0 0.0
    %225 = vmatpush1.msra.mxu0 0.0
    %226 = vmatprep.subr.mxu0 0.0
    %227 = vmatpush1.msra.mxu0 0.0
    %228 = vmatprep.subr.mxu0 0.0
    %229 = vmatpush1.msra.mxu0 0.0
    %230 = vmatprep.subr.mxu0 0.0
    %231 = vmatpush1.msra.mxu0 0.0
    %232 = vmatprep.subr.mxu0 0.0
    %233 = vmatpush1.msra.mxu0 0.0
    %234 = vmatprep.subr.mxu0 0.0
    %235 = vmatpush1.msra.mxu0 0.0
    %236 = vmatprep.subr.mxu0 0.0
    %237 = vmatpush1.msra.mxu0 0.0
    %238 = vmatprep.subr.mxu0 0.0
    %239 = vmatpush1.msra.mxu0 0.0
    %240 = vmatprep.subr.mxu0 0.0
    %241 = vmatpush1.msra.mxu0 0.0
    %242 = vmatprep.subr.mxu0 0.0
    %243 = vmatpush1.msra.mxu0 0.0
    %244 = vmatprep.subr.mxu0 0.0
    %245 = vmatpush1.msra.mxu0 0.0
    %246 = vmatprep.subr.mxu0 0.0
    %247 = vmatpush1.msra.mxu0 0.0
    %248 = vmatprep.subr.mxu0 0.0
    %249 = vmatpush1.msra.mxu0 0.0
    %250 = vmatprep.subr.mxu0 0.0
    %251 = vmatpush1.msra.mxu0 0.0
    %252 = vmatprep.subr.mxu0 0.0
    %253 = vmatpush1.msra.mxu0 0.0
    %254 = vmatprep.subr.mxu0 0.0
    %255 = vmatpush1.msra.mxu0 0.0
    %256 = vmatprep.subr.mxu0 0.0
    %257 = vmatpush1.msra.mxu0 0.0
    %258 = vmatprep.mubr.f32.mxu0 0.0
    %259 = vmatmul.mubr.f32.gmra.mrb[0].mxu0 %v97
    %v260 = vpop.f32.mrb[0].mxu0
    %v261 = vadd.f32 0.0, %v260
    %v262 = vpop.f32.mrb[0].mxu0
    %263 = vdwg.mxu0
    %265 = vrot.lane.b32.xlu0 %v193, 32
    %v266 = vpop.permute.xlu0 %265
    %v267 = vsel %vm95, %v266, 0
    %269 = vmatprep.subr.mxu0 0.0
    %270 = vmatpush1.msra.mxu0 %v83
    %271 = vmatprep.subr.mxu0 0.0
    %272 = vmatpush1.msra.mxu0 %v84
    %273 = vmatprep.subr.mxu0 0.0
    %274 = vmatpush1.msra.mxu0 %v85
    %275 = vmatprep.subr.mxu0 0.0
    %276 = vmatpush1.msra.mxu0 %v86
    %277 = vmatprep.subr.mxu0 0.0
    %278 = vmatpush1.msra.mxu0 0.0
    %279 = vmatprep.subr.mxu0 0.0
    %280 = vmatpush1.msra.mxu0 0.0
    %281 = vmatprep.subr.mxu0 0.0
    %282 = vmatpush1.msra.mxu0 0.0
    %283 = vmatprep.subr.mxu0 0.0
    %284 = vmatpush1.msra.mxu0 0.0
    %285 = vmatprep.subr.mxu0 0.0
    %286 = vmatpush1.msra.mxu0 0.0
    %287 = vmatprep.subr.mxu0 0.0
    %288 = vmatpush1.msra.mxu0 0.0
    %289 = vmatprep.subr.mxu0 0.0
    %290 = vmatpush1.msra.mxu0 0.0
    %291 = vmatprep.subr.mxu0 0.0
    %292 = vmatpush1.msra.mxu0 0.0
    %293 = vmatprep.subr.mxu0 0.0
    %294 = vmatpush1.msra.mxu0 0.0
    %295 = vmatprep.subr.mxu0 0.0
    %296 = vmatpush1.msra.mxu0 0.0
    %297 = vmatprep.subr.mxu0 0.0
    %298 = vmatpush1.msra.mxu0 0.0
    %299 = vmatprep.subr.mxu0 0.0
    %300 = vmatpush1.msra.mxu0 0.0
    %301 = vmatprep.subr.mxu0 0.0
    %302 = vmatpush1.msra.mxu0 0.0
    %303 = vmatprep.subr.mxu0 0.0
    %304 = vmatpush1.msra.mxu0 0.0
    %305 = vmatprep.subr.mxu0 0.0
    %306 = vmatpush1.msra.mxu0 0.0
    %307 = vmatprep.subr.mxu0 0.0
    %308 = vmatpush1.msra.mxu0 0.0
    %309 = vmatprep.subr.mxu0 0.0
    %310 = vmatpush1.msra.mxu0 0.0
    %311 = vmatprep.subr.mxu0 0.0
    %312 = vmatpush1.msra.mxu0 0.0
    %313 = vmatprep.subr.mxu0 0.0
    %314 = vmatpush1.msra.mxu0 0.0
    %315 = vmatprep.subr.mxu0 0.0
    %316 = vmatpush1.msra.mxu0 0.0
    %317 = vmatprep.subr.mxu0 0.0
    %318 = vmatpush1.msra.mxu0 0.0
    %319 = vmatprep.subr.mxu0 0.0
    %320 = vmatpush1.msra.mxu0 0.0
    %321 = vmatprep.subr.mxu0 0.0
    %322 = vmatpush1.msra.mxu0 0.0
    %323 = vmatprep.subr.mxu0 0.0
    %324 = vmatpush1.msra.mxu0 0.0
    %325 = vmatprep.subr.mxu0 0.0
    %326 = vmatpush1.msra.mxu0 0.0
    %327 = vmatprep.subr.mxu0 0.0
    %328 = vmatpush1.msra.mxu0 0.0
    %329 = vmatprep.subr.mxu0 0.0
    %330 = vmatpush1.msra.mxu0 0.0
    %331 = vmatprep.subr.mxu0 0.0
    %332 = vmatpush1.msra.mxu0 0.0
    %333 = vmatprep.mubr.f32.mxu0 0.0
    %334 = vmatmul.mubr.f32.gmra.mrb[0].mxu0 %v267
    %v335 = vpop.f32.mrb[0].mxu0
    %v336 = vadd.f32 %v261, %v335
    %v337 = vpop.f32.mrb[0].mxu0
    %338 = vdwg.mxu0
    %v340 = vlaneseq
    %v341 = vshrl.u32 %v340, 7
    %v342 = vsub.s32 0, %v341
    %v343 = vrot.slane %v91, %v342
    %v345 = vadd.f32 %v336, %v343
    %v346 = vxor.u32 %v345, 2147483648
    %v347 = vmul.f32 %v346, 1.442695
    %v348 = vpow.pop %v347
    %v349 = vadd.f32 %v348, 1.0
    %v350 = vrcp.pop %v349
    %v351 = vmul.f32 1.0, %v350
    %v352 = vtanh.pop %v345
    %v353 = vmul.f32 %v351, 0.0
    %355 = vrot.lane.b32.xlu0 %v352, 64
    %v356 = vpop.permute.xlu0 %355
    %v358 = vmul.f32 %v351, %v356
    %360 = vrot.lane.b32.xlu0 %v358, 32
    %v361 = vpop.permute.xlu0 %360
    %v363 = vadd.f32 %v353, %v361
    %v364 = vtanh.pop %v363
    %366 = vrot.lane.b32.xlu0 %v364, 64
    %v367 = vpop.permute.xlu0 %366
    %v369 = vmul.f32 %v351, %v367
    %vm370 = vcmp.eq.s32.totalorder %v93, 0
    %v371 = vsel %vm370, 1, 0
    %372 = vset.pattern.permute.xlu0 0
    %373 = vperm.xlu0 %372, %v371
    %v374 = vpop.permute.xlu0 %373
    %vm375 = vcmp.eq.s32.totalorder %v374, 1
    %v376 = vsel %vm375, %v369, 0.0
    %s377 = scalar_lea.vmem [#allocation2], 8
    %v378 = vld [vmem:[%s377] sm:$0xff]
    %379 = vmatprep.subr.mxu0 0.0
    %380 = vmatpush1.msra.mxu0 %v79
    %381 = vmatprep.subr.mxu0 0.0
    %382 = vmatpush1.msra.mxu0 %v80
    %383 = vmatprep.subr.mxu0 0.0
    %384 = vmatpush1.msra.mxu0 %v81
    %385 = vmatprep.subr.mxu0 0.0
    %386 = vmatpush1.msra.mxu0 %v82
    %387 = vmatprep.subr.mxu0 0.0
    %388 = vmatpush1.msra.mxu0 0.0
    %389 = vmatprep.subr.mxu0 0.0
    %390 = vmatpush1.msra.mxu0 0.0
    %391 = vmatprep.subr.mxu0 0.0
    %392 = vmatpush1.msra.mxu0 0.0
    %393 = vmatprep.subr.mxu0 0.0
    %394 = vmatpush1.msra.mxu0 0.0
    %395 = vmatprep.subr.mxu0 0.0
    %396 = vmatpush1.msra.mxu0 0.0
    %397 = vmatprep.subr.mxu0 0.0
    %398 = vmatpush1.msra.mxu0 0.0
    %399 = vmatprep.subr.mxu0 0.0
    %400 = vmatpush1.msra.mxu0 0.0
    %401 = vmatprep.subr.mxu0 0.0
    %402 = vmatpush1.msra.mxu0 0.0
    %403 = vmatprep.subr.mxu0 0.0
    %404 = vmatpush1.msra.mxu0 0.0
    %405 = vmatprep.subr.mxu0 0.0
    %406 = vmatpush1.msra.mxu0 0.0
    %407 = vmatprep.subr.mxu0 0.0
    %408 = vmatpush1.msra.mxu0 0.0
    %409 = vmatprep.subr.mxu0 0.0
    %410 = vmatpush1.msra.mxu0 0.0
    %411 = vmatprep.subr.mxu0 0.0
    %412 = vmatpush1.msra.mxu0 0.0
    %413 = vmatprep.subr.mxu0 0.0
    %414 = vmatpush1.msra.mxu0 0.0
    %415 = vmatprep.subr.mxu0 0.0
    %416 = vmatpush1.msra.mxu0 0.0
    %417 = vmatprep.subr.mxu0 0.0
    %418 = vmatpush1.msra.mxu0 0.0
    %419 = vmatprep.subr.mxu0 0.0
    %420 = vmatpush1.msra.mxu0 0.0
    %421 = vmatprep.subr.mxu0 0.0
    %422 = vmatpush1.msra.mxu0 0.0
    %423 = vmatprep.subr.mxu0 0.0
    %424 = vmatpush1.msra.mxu0 0.0
    %425 = vmatprep.subr.mxu0 0.0
    %426 = vmatpush1.msra.mxu0 0.0
    %427 = vmatprep.subr.mxu0 0.0
    %428 = vmatpush1.msra.mxu0 0.0
    %429 = vmatprep.subr.mxu0 0.0
    %430 = vmatpush1.msra.mxu0 0.0
    %431 = vmatprep.subr.mxu0 0.0
    %432 = vmatpush1.msra.mxu0 0.0
    %433 = vmatprep.subr.mxu0 0.0
    %434 = vmatpush1.msra.mxu0 0.0
    %435 = vmatprep.subr.mxu0 0.0
    %436 = vmatpush1.msra.mxu0 0.0
    %437 = vmatprep.subr.mxu0 0.0
    %438 = vmatpush1.msra.mxu0 0.0
    %439 = vmatprep.subr.mxu0 0.0
    %440 = vmatpush1.msra.mxu0 0.0
    %441 = vmatprep.subr.mxu0 0.0
    %442 = vmatpush1.msra.mxu0 0.0
    %443 = vmatprep.mubr.f32.mxu0 0.0
    %444 = vmatmul.mubr.f32.gmra.mrb[0].mxu0 %v267
    %v445 = vpop.f32.mrb[0].mxu0
    %v446 = vadd.f32 0.0, %v445
    %v447 = vpop.f32.mrb[0].mxu0
    %448 = vdwg.mxu0
    %v449 = vadd.f32 %v378, %v446
    %v450 = vxor.u32 %v449, 2147483648
    %v451 = vmul.f32 %v450, 1.442695
    %v452 = vpow.pop %v451
    %v453 = vadd.f32 %v452, 1.0
    %v454 = vrcp.pop %v453
    %v455 = vmul.f32 1.0, %v454
    %v456 = vtanh.pop %v449
    %v457 = vmul.f32 %v455, %v187
    %459 = vrot.lane.b32.xlu0 %v456, 64
    %v460 = vpop.permute.xlu0 %459
    %v462 = vmul.f32 %v455, %v460
    %464 = vrot.lane.b32.xlu0 %v462, 32
    %v465 = vpop.permute.xlu0 %464
    %v467 = vadd.f32 %v457, %v465
    %v468 = vtanh.pop %v467
    %470 = vrot.lane.b32.xlu0 %v468, 64
    %v471 = vpop.permute.xlu0 %470
    %v473 = vmul.f32 %v455, %v471
    %475 = vrot.lane.b32.xlu0 %v369, 32
    %v476 = vpop.permute.xlu0 %475
    %v477 = vsel %vm95, %v476, 0
    %479 = vmatprep.subr.mxu0 0.0
    %480 = vmatpush1.msra.mxu0 %v87
    %481 = vmatprep.subr.mxu0 0.0
    %482 = vmatpush1.msra.mxu0 %v88
    %483 = vmatprep.subr.mxu0 0.0
    %484 = vmatpush1.msra.mxu0 %v89
    %485 = vmatprep.subr.mxu0 0.0
    %486 = vmatpush1.msra.mxu0 %v90
    %487 = vmatprep.subr.mxu0 0.0
    %488 = vmatpush1.msra.mxu0 0.0
    %489 = vmatprep.subr.mxu0 0.0
    %490 = vmatpush1.msra.mxu0 0.0
    %491 = vmatprep.subr.mxu0 0.0
    %492 = vmatpush1.msra.mxu0 0.0
    %493 = vmatprep.subr.mxu0 0.0
    %494 = vmatpush1.msra.mxu0 0.0
    %495 = vmatprep.subr.mxu0 0.0
    %496 = vmatpush1.msra.mxu0 0.0
    %497 = vmatprep.subr.mxu0 0.0
    %498 = vmatpush1.msra.mxu0 0.0
    %499 = vmatprep.subr.mxu0 0.0
    %500 = vmatpush1.msra.mxu0 0.0
    %501 = vmatprep.subr.mxu0 0.0
    %502 = vmatpush1.msra.mxu0 0.0
    %503 = vmatprep.subr.mxu0 0.0
    %504 = vmatpush1.msra.mxu0 0.0
    %505 = vmatprep.subr.mxu0 0.0
    %506 = vmatpush1.msra.mxu0 0.0
    %507 = vmatprep.subr.mxu0 0.0
    %508 = vmatpush1.msra.mxu0 0.0
    %509 = vmatprep.subr.mxu0 0.0
    %510 = vmatpush1.msra.mxu0 0.0
    %511 = vmatprep.subr.mxu0 0.0
    %512 = vmatpush1.msra.mxu0 0.0
    %513 = vmatprep.subr.mxu0 0.0
    %514 = vmatpush1.msra.mxu0 0.0
    %515 = vmatprep.subr.mxu0 0.0
    %516 = vmatpush1.msra.mxu0 0.0
    %517 = vmatprep.subr.mxu0 0.0
    %518 = vmatpush1.msra.mxu0 0.0
    %519 = vmatprep.subr.mxu0 0.0
    %520 = vmatpush1.msra.mxu0 0.0
    %521 = vmatprep.subr.mxu0 0.0
    %522 = vmatpush1.msra.mxu0 0.0
    %523 = vmatprep.subr.mxu0 0.0
    %524 = vmatpush1.msra.mxu0 0.0
    %525 = vmatprep.subr.mxu0 0.0
    %526 = vmatpush1.msra.mxu0 0.0
    %527 = vmatprep.subr.mxu0 0.0
    %528 = vmatpush1.msra.mxu0 0.0
    %529 = vmatprep.subr.mxu0 0.0
    %530 = vmatpush1.msra.mxu0 0.0
    %531 = vmatprep.subr.mxu0 0.0
    %532 = vmatpush1.msra.mxu0 0.0
    %533 = vmatprep.subr.mxu0 0.0
    %534 = vmatpush1.msra.mxu0 0.0
    %535 = vmatprep.subr.mxu0 0.0
    %536 = vmatpush1.msra.mxu0 0.0
    %537 = vmatprep.subr.mxu0 0.0
    %538 = vmatpush1.msra.mxu0 0.0
    %539 = vmatprep.subr.mxu0 0.0
    %540 = vmatpush1.msra.mxu0 0.0
    %541 = vmatprep.subr.mxu0 0.0
    %542 = vmatpush1.msra.mxu0 0.0
    %543 = vmatprep.mubr.f32.mxu0 0.0
    %544 = vmatmul.mubr.f32.gmra.mrb[0].mxu0 %v477
    %v545 = vpop.f32.mrb[0].mxu0
    %v546 = vadd.f32 0.0, %v545
    %v547 = vpop.f32.mrb[0].mxu0
    %548 = vdwg.mxu0
    %550 = vrot.lane.b32.xlu0 %v473, 32
    %v551 = vpop.permute.xlu0 %550
    %v552 = vsel %vm95, %v551, 0
    %554 = vmatprep.subr.mxu0 0.0
    %555 = vmatpush1.msra.mxu0 %v83
    %556 = vmatprep.subr.mxu0 0.0
    %557 = vmatpush1.msra.mxu0 %v84
    %558 = vmatprep.subr.mxu0 0.0
    %559 = vmatpush1.msra.mxu0 %v85
    %560 = vmatprep.subr.mxu0 0.0
    %561 = vmatpush1.msra.mxu0 %v86
    %562 = vmatprep.subr.mxu0 0.0
    %563 = vmatpush1.msra.mxu0 0.0
    %564 = vmatprep.subr.mxu0 0.0
    %565 = vmatpush1.msra.mxu0 0.0
    %566 = vmatprep.subr.mxu0 0.0
    %567 = vmatpush1.msra.mxu0 0.0
    %568 = vmatprep.subr.mxu0 0.0
    %569 = vmatpush1.msra.mxu0 0.0
    %570 = vmatprep.subr.mxu0 0.0
    %571 = vmatpush1.msra.mxu0 0.0
    %572 = vmatprep.subr.mxu0 0.0
    %573 = vmatpush1.msra.mxu0 0.0
    %574 = vmatprep.subr.mxu0 0.0
    %575 = vmatpush1.msra.mxu0 0.0
    %576 = vmatprep.subr.mxu0 0.0
    %577 = vmatpush1.msra.mxu0 0.0
    %578 = vmatprep.subr.mxu0 0.0
    %579 = vmatpush1.msra.mxu0 0.0
    %580 = vmatprep.subr.mxu0 0.0
    %581 = vmatpush1.msra.mxu0 0.0
    %582 = vmatprep.subr.mxu0 0.0
    %583 = vmatpush1.msra.mxu0 0.0
    %584 = vmatprep.subr.mxu0 0.0
    %585 = vmatpush1.msra.mxu0 0.0
    %586 = vmatprep.subr.mxu0 0.0
    %587 = vmatpush1.msra.mxu0 0.0
    %588 = vmatprep.subr.mxu0 0.0
    %589 = vmatpush1.msra.mxu0 0.0
    %590 = vmatprep.subr.mxu0 0.0
    %591 = vmatpush1.msra.mxu0 0.0
    %592 = vmatprep.subr.mxu0 0.0
    %593 = vmatpush1.msra.mxu0 0.0
    %594 = vmatprep.subr.mxu0 0.0
    %595 = vmatpush1.msra.mxu0 0.0
    %596 = vmatprep.subr.mxu0 0.0
    %597 = vmatpush1.msra.mxu0 0.0
    %598 = vmatprep.subr.mxu0 0.0
    %599 = vmatpush1.msra.mxu0 0.0
    %600 = vmatprep.subr.mxu0 0.0
    %601 = vmatpush1.msra.mxu0 0.0
    %602 = vmatprep.subr.mxu0 0.0
    %603 = vmatpush1.msra.mxu0 0.0
    %604 = vmatprep.subr.mxu0 0.0
    %605 = vmatpush1.msra.mxu0 0.0
    %606 = vmatprep.subr.mxu0 0.0
    %607 = vmatpush1.msra.mxu0 0.0
    %608 = vmatprep.subr.mxu0 0.0
    %609 = vmatpush1.msra.mxu0 0.0
    %610 = vmatprep.subr.mxu0 0.0
    %611 = vmatpush1.msra.mxu0 0.0
    %612 = vmatprep.subr.mxu0 0.0
    %613 = vmatpush1.msra.mxu0 0.0
    %614 = vmatprep.subr.mxu0 0.0
    %615 = vmatpush1.msra.mxu0 0.0
    %616 = vmatprep.subr.mxu0 0.0
    %617 = vmatpush1.msra.mxu0 0.0
    %618 = vmatprep.mubr.f32.mxu0 0.0
    %619 = vmatmul.mubr.f32.gmra.mrb[0].mxu0 %v552
    %v620 = vpop.f32.mrb[0].mxu0
    %v621 = vadd.f32 %v546, %v620
    %v622 = vpop.f32.mrb[0].mxu0
    %623 = vdwg.mxu0
    %v624 = vadd.f32 %v621, %v343
    %v625 = vxor.u32 %v624, 2147483648
    %v626 = vmul.f32 %v625, 1.442695
    %v627 = vpow.pop %v626
    %v628 = vadd.f32 %v627, 1.0
    %v629 = vrcp.pop %v628
    %v630 = vmul.f32 1.0, %v629
    %v631 = vtanh.pop %v624
    %v632 = vmul.f32 %v630, %v363
    %634 = vrot.lane.b32.xlu0 %v631, 64
    %v635 = vpop.permute.xlu0 %634
    %v637 = vmul.f32 %v630, %v635
    %639 = vrot.lane.b32.xlu0 %v637, 32
    %v640 = vpop.permute.xlu0 %639
    %v642 = vadd.f32 %v632, %v640
    %v643 = vtanh.pop %v642
    %645 = vrot.lane.b32.xlu0 %v643, 64
    %v646 = vpop.permute.xlu0 %645
    %v648 = vmul.f32 %v630, %v646
    %vm649 = vcmp.eq.s32.totalorder %v93, 1
    %v650 = vsel %vm649, 1, 0
    %651 = vset.pattern.permute.xlu0 0
    %652 = vperm.xlu0 %651, %v650
    %v653 = vpop.permute.xlu0 %652
    %vm654 = vcmp.eq.s32.totalorder %v653, 1
    %v655 = vsel %vm654, %v648, %v376
    %s656 = scalar_lea.vmem [#allocation2], 16
    %v657 = vld [vmem:[%s656] sm:$0xff]
    %658 = vmatprep.subr.mxu0 0.0
    %659 = vmatpush1.msra.mxu0 %v79
    %660 = vmatprep.subr.mxu0 0.0
    %661 = vmatpush1.msra.mxu0 %v80
    %662 = vmatprep.subr.mxu0 0.0
    %663 = vmatpush1.msra.mxu0 %v81
    %664 = vmatprep.subr.mxu0 0.0
    %665 = vmatpush1.msra.mxu0 %v82
    %666 = vmatprep.subr.mxu0 0.0
    %667 = vmatpush1.msra.mxu0 0.0
    %668 = vmatprep.subr.mxu0 0.0
    %669 = vmatpush1.msra.mxu0 0.0
    %670 = vmatprep.subr.mxu0 0.0
    %671 = vmatpush1.msra.mxu0 0.0
    %672 = vmatprep.subr.mxu0 0.0
    %673 = vmatpush1.msra.mxu0 0.0
    %674 = vmatprep.subr.mxu0 0.0
    %675 = vmatpush1.msra.mxu0 0.0
    %676 = vmatprep.subr.mxu0 0.0
    %677 = vmatpush1.msra.mxu0 0.0
    %678 = vmatprep.subr.mxu0 0.0
    %679 = vmatpush1.msra.mxu0 0.0
    %680 = vmatprep.subr.mxu0 0.0
    %681 = vmatpush1.msra.mxu0 0.0
    %682 = vmatprep.subr.mxu0 0.0
    %683 = vmatpush1.msra.mxu0 0.0
    %684 = vmatprep.subr.mxu0 0.0
    %685 = vmatpush1.msra.mxu0 0.0
    %686 = vmatprep.subr.mxu0 0.0
    %687 = vmatpush1.msra.mxu0 0.0
    %688 = vmatprep.subr.mxu0 0.0
    %689 = vmatpush1.msra.mxu0 0.0
    %690 = vmatprep.subr.mxu0 0.0
    %691 = vmatpush1.msra.mxu0 0.0
    %692 = vmatprep.subr.mxu0 0.0
    %693 = vmatpush1.msra.mxu0 0.0
    %694 = vmatprep.subr.mxu0 0.0
    %695 = vmatpush1.msra.mxu0 0.0
    %696 = vmatprep.subr.mxu0 0.0
    %697 = vmatpush1.msra.mxu0 0.0
    %698 = vmatprep.subr.mxu0 0.0
    %699 = vmatpush1.msra.mxu0 0.0
    %700 = vmatprep.subr.mxu0 0.0
    %701 = vmatpush1.msra.mxu0 0.0
    %702 = vmatprep.subr.mxu0 0.0
    %703 = vmatpush1.msra.mxu0 0.0
    %704 = vmatprep.subr.mxu0 0.0
    %705 = vmatpush1.msra.mxu0 0.0
    %706 = vmatprep.subr.mxu0 0.0
    %707 = vmatpush1.msra.mxu0 0.0
    %708 = vmatprep.subr.mxu0 0.0
    %709 = vmatpush1.msra.mxu0 0.0
    %710 = vmatprep.subr.mxu0 0.0
    %711 = vmatpush1.msra.mxu0 0.0
    %712 = vmatprep.subr.mxu0 0.0
    %713 = vmatpush1.msra.mxu0 0.0
    %714 = vmatprep.subr.mxu0 0.0
    %715 = vmatpush1.msra.mxu0 0.0
    %716 = vmatprep.subr.mxu0 0.0
    %717 = vmatpush1.msra.mxu0 0.0
    %718 = vmatprep.subr.mxu0 0.0
    %719 = vmatpush1.msra.mxu0 0.0
    %720 = vmatprep.subr.mxu0 0.0
    %721 = vmatpush1.msra.mxu0 0.0
    %722 = vmatprep.mubr.f32.mxu0 0.0
    %723 = vmatmul.mubr.f32.gmra.mrb[0].mxu0 %v552
    %v724 = vpop.f32.mrb[0].mxu0
    %v725 = vadd.f32 0.0, %v724
    %v726 = vpop.f32.mrb[0].mxu0
    %727 = vdwg.mxu0
    %v728 = vadd.f32 %v657, %v725
    %v729 = vxor.u32 %v728, 2147483648
    %v730 = vmul.f32 %v729, 1.442695
    %v731 = vpow.pop %v730
    %v732 = vadd.f32 %v731, 1.0
    %v733 = vrcp.pop %v732
    %v734 = vmul.f32 1.0, %v733
    %v735 = vtanh.pop %v728
    %v736 = vmul.f32 %v734, %v467
    %738 = vrot.lane.b32.xlu0 %v735, 64
    %v739 = vpop.permute.xlu0 %738
    %v741 = vmul.f32 %v734, %v739
    %743 = vrot.lane.b32.xlu0 %v741, 32
    %v744 = vpop.permute.xlu0 %743
    %v746 = vadd.f32 %v736, %v744
    %v747 = vtanh.pop %v746
    %749 = vrot.lane.b32.xlu0 %v747, 64
    %v750 = vpop.permute.xlu0 %749
    %v752 = vmul.f32 %v734, %v750
    %754 = vrot.lane.b32.xlu0 %v648, 32
    %v755 = vpop.permute.xlu0 %754
    %v756 = vsel %vm95, %v755, 0
    %758 = vmatprep.subr.mxu0 0.0
    %759 = vmatpush1.msra.mxu0 %v87
    %760 = vmatprep.subr.mxu0 0.0
    %761 = vmatpush1.msra.mxu0 %v88
    %762 = vmatprep.subr.mxu0 0.0
    %763 = vmatpush1.msra.mxu0 %v89
    %764 = vmatprep.subr.mxu0 0.0
    %765 = vmatpush1.msra.mxu0 %v90
    %766 = vmatprep.subr.mxu0 0.0
    %767 = vmatpush1.msra.mxu0 0.0
    %768 = vmatprep.subr.mxu0 0.0
    %769 = vmatpush1.msra.mxu0 0.0
    %770 = vmatprep.subr.mxu0 0.0
    %771 = vmatpush1.msra.mxu0 0.0
    %772 = vmatprep.subr.mxu0 0.0
    %773 = vmatpush1.msra.mxu0 0.0
    %774 = vmatprep.subr.mxu0 0.0
    %775 = vmatpush1.msra.mxu0 0.0
    %776 = vmatprep.subr.mxu0 0.0
    %777 = vmatpush1.msra.mxu0 0.0
    %778 = vmatprep.subr.mxu0 0.0
    %779 = vmatpush1.msra.mxu0 0.0
    %780 = vmatprep.subr.mxu0 0.0
    %781 = vmatpush1.msra.mxu0 0.0
    %782 = vmatprep.subr.mxu0 0.0
    %783 = vmatpush1.msra.mxu0 0.0
    %784 = vmatprep.subr.mxu0 0.0
    %785 = vmatpush1.msra.mxu0 0.0
    %786 = vmatprep.subr.mxu0 0.0
    %787 = vmatpush1.msra.mxu0 0.0
    %788 = vmatprep.subr.mxu0 0.0
    %789 = vmatpush1.msra.mxu0 0.0
    %790 = vmatprep.subr.mxu0 0.0
    %791 = vmatpush1.msra.mxu0 0.0
    %792 = vmatprep.subr.mxu0 0.0
    %793 = vmatpush1.msra.mxu0 0.0
    %794 = vmatprep.subr.mxu0 0.0
    %795 = vmatpush1.msra.mxu0 0.0
    %796 = vmatprep.subr.mxu0 0.0
    %797 = vmatpush1.msra.mxu0 0.0
    %798 = vmatprep.subr.mxu0 0.0
    %799 = vmatpush1.msra.mxu0 0.0
    %800 = vmatprep.subr.mxu0 0.0
    %801 = vmatpush1.msra.mxu0 0.0
    %802 = vmatprep.subr.mxu0 0.0
    %803 = vmatpush1.msra.mxu0 0.0
    %804 = vmatprep.subr.mxu0 0.0
    %805 = vmatpush1.msra.mxu0 0.0
    %806 = vmatprep.subr.mxu0 0.0
    %807 = vmatpush1.msra.mxu0 0.0
    %808 = vmatprep.subr.mxu0 0.0
    %809 = vmatpush1.msra.mxu0 0.0
    %810 = vmatprep.subr.mxu0 0.0
    %811 = vmatpush1.msra.mxu0 0.0
    %812 = vmatprep.subr.mxu0 0.0
    %813 = vmatpush1.msra.mxu0 0.0
    %814 = vmatprep.subr.mxu0 0.0
    %815 = vmatpush1.msra.mxu0 0.0
    %816 = vmatprep.subr.mxu0 0.0
    %817 = vmatpush1.msra.mxu0 0.0
    %818 = vmatprep.subr.mxu0 0.0
    %819 = vmatpush1.msra.mxu0 0.0
    %820 = vmatprep.subr.mxu0 0.0
    %821 = vmatpush1.msra.mxu0 0.0
    %822 = vmatprep.mubr.f32.mxu0 0.0
    %823 = vmatmul.mubr.f32.gmra.mrb[0].mxu0 %v756
    %v824 = vpop.f32.mrb[0].mxu0
    %v825 = vadd.f32 0.0, %v824
    %v826 = vpop.f32.mrb[0].mxu0
    %827 = vdwg.mxu0
    %829 = vrot.lane.b32.xlu0 %v752, 32
    %v830 = vpop.permute.xlu0 %829
    %v831 = vsel %vm95, %v830, 0
    %833 = vmatprep.subr.mxu0 0.0
    %834 = vmatpush1.msra.mxu0 %v83
    %835 = vmatprep.subr.mxu0 0.0
    %836 = vmatpush1.msra.mxu0 %v84
    %837 = vmatprep.subr.mxu0 0.0
    %838 = vmatpush1.msra.mxu0 %v85
    %839 = vmatprep.subr.mxu0 0.0
    %840 = vmatpush1.msra.mxu0 %v86
    %841 = vmatprep.subr.mxu0 0.0
    %842 = vmatpush1.msra.mxu0 0.0
    %843 = vmatprep.subr.mxu0 0.0
    %844 = vmatpush1.msra.mxu0 0.0
    %845 = vmatprep.subr.mxu0 0.0
    %846 = vmatpush1.msra.mxu0 0.0
    %847 = vmatprep.subr.mxu0 0.0
    %848 = vmatpush1.msra.mxu0 0.0
    %849 = vmatprep.subr.mxu0 0.0
    %850 = vmatpush1.msra.mxu0 0.0
    %851 = vmatprep.subr.mxu0 0.0
    %852 = vmatpush1.msra.mxu0 0.0
    %853 = vmatprep.subr.mxu0 0.0
    %854 = vmatpush1.msra.mxu0 0.0
    %855 = vmatprep.subr.mxu0 0.0
    %856 = vmatpush1.msra.mxu0 0.0
    %857 = vmatprep.subr.mxu0 0.0
    %858 = vmatpush1.msra.mxu0 0.0
    %859 = vmatprep.subr.mxu0 0.0
    %860 = vmatpush1.msra.mxu0 0.0
    %861 = vmatprep.subr.mxu0 0.0
    %862 = vmatpush1.msra.mxu0 0.0
    %863 = vmatprep.subr.mxu0 0.0
    %864 = vmatpush1.msra.mxu0 0.0
    %865 = vmatprep.subr.mxu0 0.0
    %866 = vmatpush1.msra.mxu0 0.0
    %867 = vmatprep.subr.mxu0 0.0
    %868 = vmatpush1.msra.mxu0 0.0
    %869 = vmatprep.subr.mxu0 0.0
    %870 = vmatpush1.msra.mxu0 0.0
    %871 = vmatprep.subr.mxu0 0.0
    %872 = vmatpush1.msra.mxu0 0.0
    %873 = vmatprep.subr.mxu0 0.0
    %874 = vmatpush1.msra.mxu0 0.0
    %875 = vmatprep.subr.mxu0 0.0
    %876 = vmatpush1.msra.mxu0 0.0
    %877 = vmatprep.subr.mxu0 0.0
    %878 = vmatpush1.msra.mxu0 0.0
    %879 = vmatprep.subr.mxu0 0.0
    %880 = vmatpush1.msra.mxu0 0.0
    %881 = vmatprep.subr.mxu0 0.0
    %882 = vmatpush1.msra.mxu0 0.0
    %883 = vmatprep.subr.mxu0 0.0
    %884 = vmatpush1.msra.mxu0 0.0
    %885 = vmatprep.subr.mxu0 0.0
    %886 = vmatpush1.msra.mxu0 0.0
    %887 = vmatprep.subr.mxu0 0.0
    %888 = vmatpush1.msra.mxu0 0.0
    %889 = vmatprep.subr.mxu0 0.0
    %890 = vmatpush1.msra.mxu0 0.0
    %891 = vmatprep.subr.mxu0 0.0
    %892 = vmatpush1.msra.mxu0 0.0
    %893 = vmatprep.subr.mxu0 0.0
    %894 = vmatpush1.msra.mxu0 0.0
    %895 = vmatprep.subr.mxu0 0.0
    %896 = vmatpush1.msra.mxu0 0.0
    %897 = vmatprep.mubr.f32.mxu0 0.0
    %898 = vmatmul.mubr.f32.gmra.mrb[0].mxu0 %v831
    %v899 = vpop.f32.mrb[0].mxu0
    %v900 = vadd.f32 %v825, %v899
    %v901 = vpop.f32.mrb[0].mxu0
    %902 = vdwg.mxu0
    %v903 = vadd.f32 %v900, %v343
    %v904 = vxor.u32 %v903, 2147483648
    %v905 = vmul.f32 %v904, 1.442695
    %v906 = vpow.pop %v905
    %v907 = vadd.f32 %v906, 1.0
    %v908 = vrcp.pop %v907
    %v909 = vmul.f32 1.0, %v908
    %v910 = vtanh.pop %v903
    %v911 = vmul.f32 %v909, %v642
    %913 = vrot.lane.b32.xlu0 %v910, 64
    %v914 = vpop.permute.xlu0 %913
    %v916 = vmul.f32 %v909, %v914
    %918 = vrot.lane.b32.xlu0 %v916, 32
    %v919 = vpop.permute.xlu0 %918
    %v921 = vadd.f32 %v911, %v919
    %v922 = vtanh.pop %v921
    %924 = vrot.lane.b32.xlu0 %v922, 64
    %v925 = vpop.permute.xlu0 %924
    %v927 = vmul.f32 %v909, %v925
    %vm928 = vcmp.eq.s32.totalorder %v93, 2
    %v929 = vsel %vm928, 1, 0
    %930 = vset.pattern.permute.xlu0 0
    %931 = vperm.xlu0 %930, %v929
    %v932 = vpop.permute.xlu0 %931
    %vm933 = vcmp.eq.s32.totalorder %v932, 1
    %v934 = vsel %vm933, %v927, %v655
    %s935 = scalar_lea.vmem [#allocation2], 24
    %v936 = vld [vmem:[%s935] sm:$0xff]
    %937 = vmatprep.subr.mxu0 0.0
    %938 = vmatpush1.msra.mxu0 %v79
    %939 = vmatprep.subr.mxu0 0.0
    %940 = vmatpush1.msra.mxu0 %v80
    %941 = vmatprep.subr.mxu0 0.0
    %942 = vmatpush1.msra.mxu0 %v81
    %943 = vmatprep.subr.mxu0 0.0
    %944 = vmatpush1.msra.mxu0 %v82
    %945 = vmatprep.subr.mxu0 0.0
    %946 = vmatpush1.msra.mxu0 0.0
    %947 = vmatprep.subr.mxu0 0.0
    %948 = vmatpush1.msra.mxu0 0.0
    %949 = vmatprep.subr.mxu0 0.0
    %950 = vmatpush1.msra.mxu0 0.0
    %951 = vmatprep.subr.mxu0 0.0
    %952 = vmatpush1.msra.mxu0 0.0
    %953 = vmatprep.subr.mxu0 0.0
    %954 = vmatpush1.msra.mxu0 0.0
    %955 = vmatprep.subr.mxu0 0.0
    %956 = vmatpush1.msra.mxu0 0.0
    %957 = vmatprep.subr.mxu0 0.0
    %958 = vmatpush1.msra.mxu0 0.0
    %959 = vmatprep.subr.mxu0 0.0
    %960 = vmatpush1.msra.mxu0 0.0
    %961 = vmatprep.subr.mxu0 0.0
    %962 = vmatpush1.msra.mxu0 0.0
    %963 = vmatprep.subr.mxu0 0.0
    %964 = vmatpush1.msra.mxu0 0.0
    %965 = vmatprep.subr.mxu0 0.0
    %966 = vmatpush1.msra.mxu0 0.0
    %967 = vmatprep.subr.mxu0 0.0
    %968 = vmatpush1.msra.mxu0 0.0
    %969 = vmatprep.subr.mxu0 0.0
    %970 = vmatpush1.msra.mxu0 0.0
    %971 = vmatprep.subr.mxu0 0.0
    %972 = vmatpush1.msra.mxu0 0.0
    %973 = vmatprep.subr.mxu0 0.0
    %974 = vmatpush1.msra.mxu0 0.0
    %975 = vmatprep.subr.mxu0 0.0
    %976 = vmatpush1.msra.mxu0 0.0
    %977 = vmatprep.subr.mxu0 0.0
    %978 = vmatpush1.msra.mxu0 0.0
    %979 = vmatprep.subr.mxu0 0.0
    %980 = vmatpush1.msra.mxu0 0.0
    %981 = vmatprep.subr.mxu0 0.0
    %982 = vmatpush1.msra.mxu0 0.0
    %983 = vmatprep.subr.mxu0 0.0
    %984 = vmatpush1.msra.mxu0 0.0
    %985 = vmatprep.subr.mxu0 0.0
    %986 = vmatpush1.msra.mxu0 0.0
    %987 = vmatprep.subr.mxu0 0.0
    %988 = vmatpush1.msra.mxu0 0.0
    %989 = vmatprep.subr.mxu0 0.0
    %990 = vmatpush1.msra.mxu0 0.0
    %991 = vmatprep.subr.mxu0 0.0
    %992 = vmatpush1.msra.mxu0 0.0
    %993 = vmatprep.subr.mxu0 0.0
    %994 = vmatpush1.msra.mxu0 0.0
    %995 = vmatprep.subr.mxu0 0.0
    %996 = vmatpush1.msra.mxu0 0.0
    %997 = vmatprep.subr.mxu0 0.0
    %998 = vmatpush1.msra.mxu0 0.0
    %999 = vmatprep.subr.mxu0 0.0
    %1000 = vmatpush1.msra.mxu0 0.0
    %1001 = vmatprep.mubr.f32.mxu0 0.0
    %1002 = vmatmul.mubr.f32.gmra.mrb[0].mxu0 %v831
    %v1003 = vpop.f32.mrb[0].mxu0
    %v1004 = vadd.f32 0.0, %v1003
    %v1005 = vpop.f32.mrb[0].mxu0
    %1006 = vdwg.mxu0
    %v1007 = vadd.f32 %v936, %v1004
    %v1008 = vxor.u32 %v1007, 2147483648
    %v1009 = vmul.f32 %v1008, 1.442695
    %v1010 = vpow.pop %v1009
    %v1011 = vadd.f32 %v1010, 1.0
    %v1012 = vrcp.pop %v1011
    %v1013 = vmul.f32 1.0, %v1012
    %v1014 = vtanh.pop %v1007
    %v1015 = vmul.f32 %v1013, %v746
    %1017 = vrot.lane.b32.xlu0 %v1014, 64
    %v1018 = vpop.permute.xlu0 %1017
    %v1020 = vmul.f32 %v1013, %v1018
    %1022 = vrot.lane.b32.xlu0 %v1020, 32
    %v1023 = vpop.permute.xlu0 %1022
    %v1025 = vadd.f32 %v1015, %v1023
    %v1026 = vtanh.pop %v1025
    %1028 = vrot.lane.b32.xlu0 %v1026, 64
    %v1029 = vpop.permute.xlu0 %1028
    %v1031 = vmul.f32 %v1013, %v1029
    %1033 = vrot.lane.b32.xlu0 %v927, 32
    %v1034 = vpop.permute.xlu0 %1033
    %v1035 = vsel %vm95, %v1034, 0
    %1037 = vmatprep.subr.mxu0 0.0
    %1038 = vmatpush1.msra.mxu0 %v87
    %1039 = vmatprep.subr.mxu0 0.0
    %1040 = vmatpush1.msra.mxu0 %v88
    %1041 = vmatprep.subr.mxu0 0.0
    %1042 = vmatpush1.msra.mxu0 %v89
    %1043 = vmatprep.subr.mxu0 0.0
    %1044 = vmatpush1.msra.mxu0 %v90
    %1045 = vmatprep.subr.mxu0 0.0
    %1046 = vmatpush1.msra.mxu0 0.0
    %1047 = vmatprep.subr.mxu0 0.0
    %1048 = vmatpush1.msra.mxu0 0.0
    %1049 = vmatprep.subr.mxu0 0.0
    %1050 = vmatpush1.msra.mxu0 0.0
    %1051 = vmatprep.subr.mxu0 0.0
    %1052 = vmatpush1.msra.mxu0 0.0
    %1053 = vmatprep.subr.mxu0 0.0
    %1054 = vmatpush1.msra.mxu0 0.0
    %1055 = vmatprep.subr.mxu0 0.0
    %1056 = vmatpush1.msra.mxu0 0.0
    %1057 = vmatprep.subr.mxu0 0.0
    %1058 = vmatpush1.msra.mxu0 0.0
    %1059 = vmatprep.subr.mxu0 0.0
    %1060 = vmatpush1.msra.mxu0 0.0
    %1061 = vmatprep.subr.mxu0 0.0
    %1062 = vmatpush1.msra.mxu0 0.0
    %1063 = vmatprep.subr.mxu0 0.0
    %1064 = vmatpush1.msra.mxu0 0.0
    %1065 = vmatprep.subr.mxu0 0.0
    %1066 = vmatpush1.msra.mxu0 0.0
    %1067 = vmatprep.subr.mxu0 0.0
    %1068 = vmatpush1.msra.mxu0 0.0
    %1069 = vmatprep.subr.mxu0 0.0
    %1070 = vmatpush1.msra.mxu0 0.0
    %1071 = vmatprep.subr.mxu0 0.0
    %1072 = vmatpush1.msra.mxu0 0.0
    %1073 = vmatprep.subr.mxu0 0.0
    %1074 = vmatpush1.msra.mxu0 0.0
    %1075 = vmatprep.subr.mxu0 0.0
    %1076 = vmatpush1.msra.mxu0 0.0
    %1077 = vmatprep.subr.mxu0 0.0
    %1078 = vmatpush1.msra.mxu0 0.0
    %1079 = vmatprep.subr.mxu0 0.0
    %1080 = vmatpush1.msra.mxu0 0.0
    %1081 = vmatprep.subr.mxu0 0.0
    %1082 = vmatpush1.msra.mxu0 0.0
    %1083 = vmatprep.subr.mxu0 0.0
    %1084 = vmatpush1.msra.mxu0 0.0
    %1085 = vmatprep.subr.mxu0 0.0
    %1086 = vmatpush1.msra.mxu0 0.0
    %1087 = vmatprep.subr.mxu0 0.0
    %1088 = vmatpush1.msra.mxu0 0.0
    %1089 = vmatprep.subr.mxu0 0.0
    %1090 = vmatpush1.msra.mxu0 0.0
    %1091 = vmatprep.subr.mxu0 0.0
    %1092 = vmatpush1.msra.mxu0 0.0
    %1093 = vmatprep.subr.mxu0 0.0
    %1094 = vmatpush1.msra.mxu0 0.0
    %1095 = vmatprep.subr.mxu0 0.0
    %1096 = vmatpush1.msra.mxu0 0.0
    %1097 = vmatprep.subr.mxu0 0.0
    %1098 = vmatpush1.msra.mxu0 0.0
    %1099 = vmatprep.subr.mxu0 0.0
    %1100 = vmatpush1.msra.mxu0 0.0
    %1101 = vmatprep.mubr.f32.mxu0 0.0
    %1102 = vmatmul.mubr.f32.gmra.mrb[0].mxu0 %v1035
    %v1103 = vpop.f32.mrb[0].mxu0
    %v1104 = vadd.f32 0.0, %v1103
    %v1105 = vpop.f32.mrb[0].mxu0
    %1106 = vdwg.mxu0
    %1108 = vrot.lane.b32.xlu0 %v1031, 32
    %v1109 = vpop.permute.xlu0 %1108
    %v1110 = vsel %vm95, %v1109, 0
    %1112 = vmatprep.subr.mxu0 0.0
    %1113 = vmatpush1.msra.mxu0 %v83
    %1114 = vmatprep.subr.mxu0 0.0
    %1115 = vmatpush1.msra.mxu0 %v84
    %1116 = vmatprep.subr.mxu0 0.0
    %1117 = vmatpush1.msra.mxu0 %v85
    %1118 = vmatprep.subr.mxu0 0.0
    %1119 = vmatpush1.msra.mxu0 %v86
    %1120 = vmatprep.subr.mxu0 0.0
    %1121 = vmatpush1.msra.mxu0 0.0
    %1122 = vmatprep.subr.mxu0 0.0
    %1123 = vmatpush1.msra.mxu0 0.0
    %1124 = vmatprep.subr.mxu0 0.0
    %1125 = vmatpush1.msra.mxu0 0.0
    %1126 = vmatprep.subr.mxu0 0.0
    %1127 = vmatpush1.msra.mxu0 0.0
    %1128 = vmatprep.subr.mxu0 0.0
    %1129 = vmatpush1.msra.mxu0 0.0
    %1130 = vmatprep.subr.mxu0 0.0
    %1131 = vmatpush1.msra.mxu0 0.0
    %1132 = vmatprep.subr.mxu0 0.0
    %1133 = vmatpush1.msra.mxu0 0.0
    %1134 = vmatprep.subr.mxu0 0.0
    %1135 = vmatpush1.msra.mxu0 0.0
    %1136 = vmatprep.subr.mxu0 0.0
    %1137 = vmatpush1.msra.mxu0 0.0
    %1138 = vmatprep.subr.mxu0 0.0
    %1139 = vmatpush1.msra.mxu0 0.0
    %1140 = vmatprep.subr.mxu0 0.0
    %1141 = vmatpush1.msra.mxu0 0.0
    %1142 = vmatprep.subr.mxu0 0.0
    %1143 = vmatpush1.msra.mxu0 0.0
    %1144 = vmatprep.subr.mxu0 0.0
    %1145 = vmatpush1.msra.mxu0 0.0
    %1146 = vmatprep.subr.mxu0 0.0
    %1147 = vmatpush1.msra.mxu0 0.0
    %1148 = vmatprep.subr.mxu0 0.0
    %1149 = vmatpush1.msra.mxu0 0.0
    %1150 = vmatprep.subr.mxu0 0.0
    %1151 = vmatpush1.msra.mxu0 0.0
    %1152 = vmatprep.subr.mxu0 0.0
    %1153 = vmatpush1.msra.mxu0 0.0
    %1154 = vmatprep.subr.mxu0 0.0
    %1155 = vmatpush1.msra.mxu0 0.0
    %1156 = vmatprep.subr.mxu0 0.0
    %1157 = vmatpush1.msra.mxu0 0.0
    %1158 = vmatprep.subr.mxu0 0.0
    %1159 = vmatpush1.msra.mxu0 0.0
    %1160 = vmatprep.subr.mxu0 0.0
    %1161 = vmatpush1.msra.mxu0 0.0
    %1162 = vmatprep.subr.mxu0 0.0
    %1163 = vmatpush1.msra.mxu0 0.0
    %1164 = vmatprep.subr.mxu0 0.0
    %1165 = vmatpush1.msra.mxu0 0.0
    %1166 = vmatprep.subr.mxu0 0.0
    %1167 = vmatpush1.msra.mxu0 0.0
    %1168 = vmatprep.subr.mxu0 0.0
    %1169 = vmatpush1.msra.mxu0 0.0
    %1170 = vmatprep.subr.mxu0 0.0
    %1171 = vmatpush1.msra.mxu0 0.0
    %1172 = vmatprep.subr.mxu0 0.0
    %1173 = vmatpush1.msra.mxu0 0.0
    %1174 = vmatprep.subr.mxu0 0.0
    %1175 = vmatpush1.msra.mxu0 0.0
    %1176 = vmatprep.mubr.f32.mxu0 0.0
    %1177 = vmatmul.mubr.f32.gmra.mrb[0].mxu0 %v1110
    %v1178 = vpop.f32.mrb[0].mxu0
    %v1179 = vadd.f32 %v1104, %v1178
    %v1180 = vpop.f32.mrb[0].mxu0
    %1181 = vdwg.mxu0
    %v1182 = vadd.f32 %v1179, %v343
    %v1183 = vxor.u32 %v1182, 2147483648
    %v1184 = vmul.f32 %v1183, 1.442695
    %v1185 = vpow.pop %v1184
    %v1186 = vadd.f32 %v1185, 1.0
    %v1187 = vrcp.pop %v1186
    %v1188 = vmul.f32 1.0, %v1187
    %v1189 = vtanh.pop %v1182
    %v1190 = vmul.f32 %v1188, %v921
    %1192 = vrot.lane.b32.xlu0 %v1189, 64
    %v1193 = vpop.permute.xlu0 %1192
    %v1195 = vmul.f32 %v1188, %v1193
    %1197 = vrot.lane.b32.xlu0 %v1195, 32
    %v1198 = vpop.permute.xlu0 %1197
    %v1200 = vadd.f32 %v1190, %v1198
    %v1201 = vtanh.pop %v1200
    %1203 = vrot.lane.b32.xlu0 %v1201, 64
    %v1204 = vpop.permute.xlu0 %1203
    %v1206 = vmul.f32 %v1188, %v1204
    %vm1207 = vcmp.eq.s32.totalorder %v93, 3
    %v1208 = vsel %vm1207, 1, 0
    %1209 = vset.pattern.permute.xlu0 0
    %1210 = vperm.xlu0 %1209, %v1208
    %v1211 = vpop.permute.xlu0 %1210
    %vm1212 = vcmp.eq.s32.totalorder %v1211, 1
    %v1213 = vsel %vm1212, %v1206, %v934
    %s1214 = scalar_lea.vmem [#allocation2], 32
    %v1215 = vld [vmem:[%s1214] sm:$0xff]
    %1216 = vmatprep.subr.mxu0 0.0
    %1217 = vmatpush1.msra.mxu0 %v79
    %1218 = vmatprep.subr.mxu0 0.0
    %1219 = vmatpush1.msra.mxu0 %v80
    %1220 = vmatprep.subr.mxu0 0.0
    %1221 = vmatpush1.msra.mxu0 %v81
    %1222 = vmatprep.subr.mxu0 0.0
    %1223 = vmatpush1.msra.mxu0 %v82
    %1224 = vmatprep.subr.mxu0 0.0
    %1225 = vmatpush1.msra.mxu0 0.0
    %1226 = vmatprep.subr.mxu0 0.0
    %1227 = vmatpush1.msra.mxu0 0.0
    %1228 = vmatprep.subr.mxu0 0.0
    %1229 = vmatpush1.msra.mxu0 0.0
    %1230 = vmatprep.subr.mxu0 0.0
    %1231 = vmatpush1.msra.mxu0 0.0
    %1232 = vmatprep.subr.mxu0 0.0
    %1233 = vmatpush1.msra.mxu0 0.0
    %1234 = vmatprep.subr.mxu0 0.0
    %1235 = vmatpush1.msra.mxu0 0.0
    %1236 = vmatprep.subr.mxu0 0.0
    %1237 = vmatpush1.msra.mxu0 0.0
    %1238 = vmatprep.subr.mxu0 0.0
    %1239 = vmatpush1.msra.mxu0 0.0
    %1240 = vmatprep.subr.mxu0 0.0
    %1241 = vmatpush1.msra.mxu0 0.0
    %1242 = vmatprep.subr.mxu0 0.0
    %1243 = vmatpush1.msra.mxu0 0.0
    %1244 = vmatprep.subr.mxu0 0.0
    %1245 = vmatpush1.msra.mxu0 0.0
    %1246 = vmatprep.subr.mxu0 0.0
    %1247 = vmatpush1.msra.mxu0 0.0
    %1248 = vmatprep.subr.mxu0 0.0
    %1249 = vmatpush1.msra.mxu0 0.0
    %1250 = vmatprep.subr.mxu0 0.0
    %1251 = vmatpush1.msra.mxu0 0.0
    %1252 = vmatprep.subr.mxu0 0.0
    %1253 = vmatpush1.msra.mxu0 0.0
    %1254 = vmatprep.subr.mxu0 0.0
    %1255 = vmatpush1.msra.mxu0 0.0
    %1256 = vmatprep.subr.mxu0 0.0
    %1257 = vmatpush1.msra.mxu0 0.0
    %1258 = vmatprep.subr.mxu0 0.0
    %1259 = vmatpush1.msra.mxu0 0.0
    %1260 = vmatprep.subr.mxu0 0.0
    %1261 = vmatpush1.msra.mxu0 0.0
    %1262 = vmatprep.subr.mxu0 0.0
    %1263 = vmatpush1.msra.mxu0 0.0
    %1264 = vmatprep.subr.mxu0 0.0
    %1265 = vmatpush1.msra.mxu0 0.0
    %1266 = vmatprep.subr.mxu0 0.0
    %1267 = vmatpush1.msra.mxu0 0.0
    %1268 = vmatprep.subr.mxu0 0.0
    %1269 = vmatpush1.msra.mxu0 0.0
    %1270 = vmatprep.subr.mxu0 0.0
    %1271 = vmatpush1.msra.mxu0 0.0
    %1272 = vmatprep.subr.mxu0 0.0
    %1273 = vmatpush1.msra.mxu0 0.0
    %1274 = vmatprep.subr.mxu0 0.0
    %1275 = vmatpush1.msra.mxu0 0.0
    %1276 = vmatprep.subr.mxu0 0.0
    %1277 = vmatpush1.msra.mxu0 0.0
    %1278 = vmatprep.subr.mxu0 0.0
    %1279 = vmatpush1.msra.mxu0 0.0
    %1280 = vmatprep.mubr.f32.mxu0 0.0
    %1281 = vmatmul.mubr.f32.gmra.mrb[0].mxu0 %v1110
    %v1282 = vpop.f32.mrb[0].mxu0
    %v1283 = vadd.f32 0.0, %v1282
    %v1284 = vpop.f32.mrb[0].mxu0
    %1285 = vdwg.mxu0
    %v1286 = vadd.f32 %v1215, %v1283
    %v1287 = vxor.u32 %v1286, 2147483648
    %v1288 = vmul.f32 %v1287, 1.442695
    %v1289 = vpow.pop %v1288
    %v1290 = vadd.f32 %v1289, 1.0
    %v1291 = vrcp.pop %v1290
    %v1292 = vmul.f32 1.0, %v1291
    %v1293 = vtanh.pop %v1286
    %v1294 = vmul.f32 %v1292, %v1025
    %1296 = vrot.lane.b32.xlu0 %v1293, 64
    %v1297 = vpop.permute.xlu0 %1296
    %v1299 = vmul.f32 %v1292, %v1297
    %1301 = vrot.lane.b32.xlu0 %v1299, 32
    %v1302 = vpop.permute.xlu0 %1301
    %v1304 = vadd.f32 %v1294, %v1302
    %v1305 = vtanh.pop %v1304
    %1307 = vrot.lane.b32.xlu0 %v1305, 64
    %v1308 = vpop.permute.xlu0 %1307
    %v1310 = vmul.f32 %v1292, %v1308
    %1312 = vrot.lane.b32.xlu0 %v1206, 32
    %v1313 = vpop.permute.xlu0 %1312
    %v1314 = vsel %vm95, %v1313, 0
    %1316 = vmatprep.subr.mxu0 0.0
    %1317 = vmatpush1.msra.mxu0 %v87
    %1318 = vmatprep.subr.mxu0 0.0
    %1319 = vmatpush1.msra.mxu0 %v88
    %1320 = vmatprep.subr.mxu0 0.0
    %1321 = vmatpush1.msra.mxu0 %v89
    %1322 = vmatprep.subr.mxu0 0.0
    %1323 = vmatpush1.msra.mxu0 %v90
    %1324 = vmatprep.subr.mxu0 0.0
    %1325 = vmatpush1.msra.mxu0 0.0
    %1326 = vmatprep.subr.mxu0 0.0
    %1327 = vmatpush1.msra.mxu0 0.0
    %1328 = vmatprep.subr.mxu0 0.0
    %1329 = vmatpush1.msra.mxu0 0.0
    %1330 = vmatprep.subr.mxu0 0.0
    %1331 = vmatpush1.msra.mxu0 0.0
    %1332 = vmatprep.subr.mxu0 0.0
    %1333 = vmatpush1.msra.mxu0 0.0
    %1334 = vmatprep.subr.mxu0 0.0
    %1335 = vmatpush1.msra.mxu0 0.0
    %1336 = vmatprep.subr.mxu0 0.0
    %1337 = vmatpush1.msra.mxu0 0.0
    %1338 = vmatprep.subr.mxu0 0.0
    %1339 = vmatpush1.msra.mxu0 0.0
    %1340 = vmatprep.subr.mxu0 0.0
    %1341 = vmatpush1.msra.mxu0 0.0
    %1342 = vmatprep.subr.mxu0 0.0
    %1343 = vmatpush1.msra.mxu0 0.0
    %1344 = vmatprep.subr.mxu0 0.0
    %1345 = vmatpush1.msra.mxu0 0.0
    %1346 = vmatprep.subr.mxu0 0.0
    %1347 = vmatpush1.msra.mxu0 0.0
    %1348 = vmatprep.subr.mxu0 0.0
    %1349 = vmatpush1.msra.mxu0 0.0
    %1350 = vmatprep.subr.mxu0 0.0
    %1351 = vmatpush1.msra.mxu0 0.0
    %1352 = vmatprep.subr.mxu0 0.0
    %1353 = vmatpush1.msra.mxu0 0.0
    %1354 = vmatprep.subr.mxu0 0.0
    %1355 = vmatpush1.msra.mxu0 0.0
    %1356 = vmatprep.subr.mxu0 0.0
    %1357 = vmatpush1.msra.mxu0 0.0
    %1358 = vmatprep.subr.mxu0 0.0
    %1359 = vmatpush1.msra.mxu0 0.0
    %1360 = vmatprep.subr.mxu0 0.0
    %1361 = vmatpush1.msra.mxu0 0.0
    %1362 = vmatprep.subr.mxu0 0.0
    %1363 = vmatpush1.msra.mxu0 0.0
    %1364 = vmatprep.subr.mxu0 0.0
    %1365 = vmatpush1.msra.mxu0 0.0
    %1366 = vmatprep.subr.mxu0 0.0
    %1367 = vmatpush1.msra.mxu0 0.0
    %1368 = vmatprep.subr.mxu0 0.0
    %1369 = vmatpush1.msra.mxu0 0.0
    %1370 = vmatprep.subr.mxu0 0.0
    %1371 = vmatpush1.msra.mxu0 0.0
    %1372 = vmatprep.subr.mxu0 0.0
    %1373 = vmatpush1.msra.mxu0 0.0
    %1374 = vmatprep.subr.mxu0 0.0
    %1375 = vmatpush1.msra.mxu0 0.0
    %1376 = vmatprep.subr.mxu0 0.0
    %1377 = vmatpush1.msra.mxu0 0.0
    %1378 = vmatprep.subr.mxu0 0.0
    %1379 = vmatpush1.msra.mxu0 0.0
    %1380 = vmatprep.mubr.f32.mxu0 0.0
    %1381 = vmatmul.mubr.f32.gmra.mrb[0].mxu0 %v1314
    %v1382 = vpop.f32.mrb[0].mxu0
    %v1383 = vadd.f32 0.0, %v1382
    %v1384 = vpop.f32.mrb[0].mxu0
    %1385 = vdwg.mxu0
    %1387 = vrot.lane.b32.xlu0 %v1310, 32
    %v1388 = vpop.permute.xlu0 %1387
    %v1389 = vsel %vm95, %v1388, 0
    %1391 = vmatprep.subr.mxu0 0.0
    %1392 = vmatpush1.msra.mxu0 %v83
    %1393 = vmatprep.subr.mxu0 0.0
    %1394 = vmatpush1.msra.mxu0 %v84
    %1395 = vmatprep.subr.mxu0 0.0
    %1396 = vmatpush1.msra.mxu0 %v85
    %1397 = vmatprep.subr.mxu0 0.0
    %1398 = vmatpush1.msra.mxu0 %v86
    %1399 = vmatprep.subr.mxu0 0.0
    %1400 = vmatpush1.msra.mxu0 0.0
    %1401 = vmatprep.subr.mxu0 0.0
    %1402 = vmatpush1.msra.mxu0 0.0
    %1403 = vmatprep.subr.mxu0 0.0
    %1404 = vmatpush1.msra.mxu0 0.0
    %1405 = vmatprep.subr.mxu0 0.0
    %1406 = vmatpush1.msra.mxu0 0.0
    %1407 = vmatprep.subr.mxu0 0.0
    %1408 = vmatpush1.msra.mxu0 0.0
    %1409 = vmatprep.subr.mxu0 0.0
    %1410 = vmatpush1.msra.mxu0 0.0
    %1411 = vmatprep.subr.mxu0 0.0
    %1412 = vmatpush1.msra.mxu0 0.0
    %1413 = vmatprep.subr.mxu0 0.0
    %1414 = vmatpush1.msra.mxu0 0.0
    %1415 = vmatprep.subr.mxu0 0.0
    %1416 = vmatpush1.msra.mxu0 0.0
    %1417 = vmatprep.subr.mxu0 0.0
    %1418 = vmatpush1.msra.mxu0 0.0
    %1419 = vmatprep.subr.mxu0 0.0
    %1420 = vmatpush1.msra.mxu0 0.0
    %1421 = vmatprep.subr.mxu0 0.0
    %1422 = vmatpush1.msra.mxu0 0.0
    %1423 = vmatprep.subr.mxu0 0.0
    %1424 = vmatpush1.msra.mxu0 0.0
    %1425 = vmatprep.subr.mxu0 0.0
    %1426 = vmatpush1.msra.mxu0 0.0
    %1427 = vmatprep.subr.mxu0 0.0
    %1428 = vmatpush1.msra.mxu0 0.0
    %1429 = vmatprep.subr.mxu0 0.0
    %1430 = vmatpush1.msra.mxu0 0.0
    %1431 = vmatprep.subr.mxu0 0.0
    %1432 = vmatpush1.msra.mxu0 0.0
    %1433 = vmatprep.subr.mxu0 0.0
    %1434 = vmatpush1.msra.mxu0 0.0
    %1435 = vmatprep.subr.mxu0 0.0
    %1436 = vmatpush1.msra.mxu0 0.0
    %1437 = vmatprep.subr.mxu0 0.0
    %1438 = vmatpush1.msra.mxu0 0.0
    %1439 = vmatprep.subr.mxu0 0.0
    %1440 = vmatpush1.msra.mxu0 0.0
    %1441 = vmatprep.subr.mxu0 0.0
    %1442 = vmatpush1.msra.mxu0 0.0
    %1443 = vmatprep.subr.mxu0 0.0
    %1444 = vmatpush1.msra.mxu0 0.0
    %1445 = vmatprep.subr.mxu0 0.0
    %1446 = vmatpush1.msra.mxu0 0.0
    %1447 = vmatprep.subr.mxu0 0.0
    %1448 = vmatpush1.msra.mxu0 0.0
    %1449 = vmatprep.subr.mxu0 0.0
    %1450 = vmatpush1.msra.mxu0 0.0
    %1451 = vmatprep.subr.mxu0 0.0
    %1452 = vmatpush1.msra.mxu0 0.0
    %1453 = vmatprep.subr.mxu0 0.0
    %1454 = vmatpush1.msra.mxu0 0.0
    %1455 = vmatprep.mubr.f32.mxu0 0.0
    %1456 = vmatmul.mubr.f32.gmra.mrb[0].mxu0 %v1389
    %v1457 = vpop.f32.mrb[0].mxu0
    %v1458 = vadd.f32 %v1383, %v1457
    %v1459 = vpop.f32.mrb[0].mxu0
    %1460 = vdwg.mxu0
    %v1461 = vadd.f32 %v1458, %v343
    %v1462 = vxor.u32 %v1461, 2147483648
    %v1463 = vmul.f32 %v1462, 1.442695
    %v1464 = vpow.pop %v1463
    %v1465 = vadd.f32 %v1464, 1.0
    %v1466 = vrcp.pop %v1465
    %v1467 = vmul.f32 1.0, %v1466
    %v1468 = vtanh.pop %v1461
    %v1469 = vmul.f32 %v1467, %v1200
    %1471 = vrot.lane.b32.xlu0 %v1468, 64
    %v1472 = vpop.permute.xlu0 %1471
    %v1474 = vmul.f32 %v1467, %v1472
    %1476 = vrot.lane.b32.xlu0 %v1474, 32
    %v1477 = vpop.permute.xlu0 %1476
    %v1479 = vadd.f32 %v1469, %v1477
    %v1480 = vtanh.pop %v1479
    %1482 = vrot.lane.b32.xlu0 %v1480, 64
    %v1483 = vpop.permute.xlu0 %1482
    %v1485 = vmul.f32 %v1467, %v1483
    %vm1486 = vcmp.eq.s32.totalorder %v93, 4
    %v1487 = vsel %vm1486, 1, 0
    %1488 = vset.pattern.permute.xlu0 0
    %1489 = vperm.xlu0 %1488, %v1487
    %v1490 = vpop.permute.xlu0 %1489
    %vm1491 = vcmp.eq.s32.totalorder %v1490, 1
    %v1492 = vsel %vm1491, %v1485, %v1213
    %1494 = vrot.lane.b32.xlu0 %v1492, 32
    %v1495 = vpop.permute.xlu0 %1494
    %1497 = vst.msk [vmem:[#allocation10] sm:$0xff] %vm95, %v1495
    // Predicated region
    $region42: #{tpu_custom_call.1} parent=1 // pred_check
      _
    $region43: #{tpu_custom_call.1} parent=1 // pred_check_branch
      %1499 = sbr.rel (0) target = $region45
    $region44: #{tpu_custom_call.1} parent=1 // pred_region
      %s1501 = ssub.s32 128, 128
      %1502 = vsyncadd [#allocation4], %s1501
      %s1504 = sshll.u32 [#allocation10], 4
      %s1505 = int_to_ptr.vmem [resolvable:$true] %s1504
      %1507 = dma.vmem_to_hbm [thread:$0]  %s1505, 128, %s6, [#allocation4]
    $region45: #{tpu_custom_call.1} parent=1 // pred_fallthru
      _
    // Predicated region
    $region46: #{tpu_custom_call.1} parent=1 // pred_check
      _
    $region47: #{tpu_custom_call.1} parent=1 // pred_check_branch
      %1509 = sbr.rel (0) target = $region49
    $region48: #{tpu_custom_call.1} parent=1 // pred_region
      %1510 = dma.done [#allocation4], 128
    $region49: #{tpu_custom_call.1} parent=1 // pred_fallthru
      _
    %1511 = vsyncpa [#allocation3], 1
    %1512 = vsyncpa [#allocation6], 1
    %1513 = vsyncpa [#allocation9], 1
    %1514 = vsyncpa [#allocation4], 1

</llo_original>
